<compile_context>
chip_gen: v7x
topology: tpu7x:2x2x1
jax: 0.10.0
libtpu: 0.0.40
codegen_flags: <defaults>
</compile_context>

<pallas_src>
import numpy as np
import jax
import jax.numpy as jnp
from jax.experimental import pallas as pl
from jax.experimental.pallas import tpu as pltpu

EPS = 1e-5


# ----------------------------- fused Pallas kernel ---------------------------

def _stgcn_fused_kernel(x_ref, sscale_ref, sbias_ref, wstem_ref,
                        at_ref, wbig_ref, bnsc_ref, bnsh_ref,
                        pool_ref, whead_ref, bhead_ref, o_ref):
    """Whole forward for one block of NB samples (R = NB*V rows).

    Layout: activations are (R, T*C) with flat column index t*C + c.
    MXU operands are bf16; accumulation and all pointwise math is f32.
    """
    L, P, R, _ = at_ref.shape
    TC = bnsc_ref.shape[-1]
    bf16 = jnp.bfloat16

    # --- stem: eval-mode BatchNorm1d + fcn_in 1x1 conv (shift & bias pre-folded) ---
    xs = (x_ref[0] * sscale_ref[...]).astype(bf16)                           # (R, TCin)
    h = jnp.dot(xs, wstem_ref[...],
                preferred_element_type=jnp.float32) + sbias_ref[...]         # (R, TC) f32

    # --- ST-GCN layers (statically unrolled; fine at L=2) ---
    for l in range(L):
        # channel conv + temporal conv for ALL partitions in one wide bf16 matmul
        y = jnp.dot(h.astype(bf16), wbig_ref[l],
                    preferred_element_type=jnp.float32)                      # (R, P*TC)
        y_b = y.astype(bf16)
        # spatial graph conv + partition sum (block-diagonal A^T per partition);
        # accumulator initialised from the p=0 matmul (no zero-fill + add)
        acc = jnp.dot(at_ref[l, 0], y_b[:, 0:TC],
                      preferred_element_type=jnp.float32)                    # (R, TC)
        for p in range(1, P):
            acc = acc + jnp.dot(at_ref[l, p], y_b[:, p * TC:(p + 1) * TC],
                                preferred_element_type=jnp.float32)
        s = jnp.maximum(acc * bnsc_ref[l] + bnsh_ref[l], 0.0)                # BN + ReLU
        h = jnp.maximum(s + h, 0.0)                                          # id residual + ReLU

    # --- head: avg-pool over V (tiny f32 matmul) + fcn_out 1x1 conv (bf16) ---
    pooled = jnp.dot(pool_ref[...], h, preferred_element_type=jnp.float32)   # (NB, TC)
    out = jnp.dot(pooled.astype(bf16), whead_ref[...],
                  preferred_element_type=jnp.float32) + bhead_ref[...]       # (NB, TK)
    o_ref[0] = out.astype(o_ref.dtype)


# ----------------------------- one-time weight packing -----------------------

def make_lt_matrix(T, kernel_size, stride):
    """Matches the lt_matrix built in StgcnLayer.forward."""
    lt = np.zeros((T, T), dtype=np.float32)
    for i in range(kernel_size // stride):
        m = T - stride * i
        eye = np.eye(m, dtype=np.float32)
        eye = np.pad(eye, ((0, stride * i), (stride * i, 0)))
        lt += eye
    return jnp.asarray(lt)


def _mxu_row_target():
    """Rows per grid step: ~256 fills v6e/v7x's 256-wide MXU, 128 suffices on v2..v5."""
    try:
        kind = jax.devices()[0].device_kind.lower()
    except Exception:
        kind = ""
    if any(v in kind for v in ("v2", "v3", "v4", "v5")):
        return 128
    return 256


def _choose_block_batch(N, V, row_target):
    """Samples per grid step.  Never shrunk to force divisibility — the wrapper
    pads the batch up to a multiple of NB instead (review item)."""
    return max(1, min(N, row_target // V))


def pack_params(params, cfg, T, NB):
    """Fold/precompute every constant so the hot path is just the fused kernel."""
    V = cfg['num_node']
    Cin = cfg['in_feat']
    P = cfg['num_partitions']
    eyeT = jnp.eye(T, dtype=jnp.float32)
    eyeNB = jnp.eye(NB, dtype=jnp.float32)
    bf16 = jnp.bfloat16

    # stem: bn_in (eval) folded into scale/shift; shift & conv bias folded into sbias
    bn = params['bn_in']
    sc = bn['gamma'] / jnp.sqrt(bn['var'] + EPS)                   # (V*Cin,)
    sh = bn['beta'] - bn['mean'] * sc
    scale_vt = jnp.tile(sc.reshape(V, Cin), (1, T))                # (V, T*Cin)
    shift_vt = jnp.tile(sh.reshape(V, Cin), (1, T))
    Wf, bf = params['fcn_in']['w'], params['fcn_in']['b']          # (C0, Cin), (C0,)
    C0 = Wf.shape[0]
    wstem = jnp.kron(eyeT, Wf.T)                                   # (T*Cin, T*C0), f32 fold
    stem_bias = shift_vt @ wstem + jnp.tile(bf, T)[None, :]        # (V, T*C0), folded in f32
    sscale = jnp.tile(scale_vt, (NB, 1))                           # (NB*V, T*Cin)  f32
    sbias = jnp.tile(stem_bias, (NB, 1))                           # (NB*V, T*C0)   f32

    # ST-GCN layers
    A = params['A']
    at_list, wbig_list, bnsc_list, bnsh_list = [], [], [], []
    for lp in params['layers']:
        cin, cout = lp['cin'], lp['cout']
        assert cin == cout and lp['stride'] == 1, "only identity-residual path implemented"
        Aeff = A * lp['importance'][None]                          # edge importance
        # block-diagonal A^T over the NB samples packed into one row block
        at = jnp.stack([jnp.kron(eyeNB, Aeff[p].T) for p in range(P)])      # (P, R, R)
        lt = make_lt_matrix(T, lp['kernel'], lp['stride'])
        # fold 1x1 channel conv with temporal conv: kron(I_T,W_p) @ kron(lt,I_C) = kron(lt,W_p)
        wbig = jnp.concatenate([jnp.kron(lt, lp['conv_w'][p]) for p in range(P)],
                               axis=1)                                       # (T*cin, P*T*cout)
        s = lp['bn_gamma'] / jnp.sqrt(lp['bn_var'] + EPS)
        b = lp['bn_beta'] - lp['bn_mean'] * s
        at_list.append(at)
        wbig_list.append(wbig)
        bnsc_list.append(jnp.tile(s, T)[None, :])                  # (1, T*cout)
        bnsh_list.append(jnp.tile(b, T)[None, :])
    at_all = jnp.stack(at_list).astype(bf16)                       # (L, P, R, R)   bf16
    wbig_all = jnp.stack(wbig_list).astype(bf16)                   # (L, TC, P*TC)  bf16
    bnsc_all = jnp.stack(bnsc_list)                                # (L, 1, TC)     f32
    bnsh_all = jnp.stack(bnsh_list)                                # (L, 1, TC)     f32

    # head: avg-pool over V as a matmul + fcn_out
    Wo, bo = params['fcn_out']['w'], params['fcn_out']['b']
    K = Wo.shape[0]
    whead = jnp.kron(eyeT, Wo.T).astype(bf16)                      # (T*Clast, T*K) bf16
    bhead = jnp.tile(bo, T)[None, :]                               # (1, T*K)       f32
    pool = jnp.kron(eyeNB, jnp.ones((1, V), jnp.float32) / V)      # (NB, NB*V)     f32

    packed = dict(sscale=sscale, sbias=sbias, wstem=wstem.astype(bf16),
                  at=at_all, wbig=wbig_all, bnsc=bnsc_all, bnsh=bnsh_all,
                  pool=pool, whead=whead, bhead=bhead)
    meta = dict(NB=NB, V=V, Cin=Cin, C0=C0, K=K, P=P, L=len(params['layers']))
    return packed, meta


# ----------------------------- fused forward builder -------------------------

def build_stgcn_forward(params, cfg, T, N):
    V = cfg['num_node']
    NB = _choose_block_batch(N, V, _mxu_row_target())
    packed, meta = pack_params(params, cfg, T, NB)
    L, P = meta['L'], meta['P']
    Cin, C0, K = meta['Cin'], meta['C0'], meta['K']
    R = NB * V
    TCin, TC, TK = T * Cin, T * C0, T * K
    G = -(-N // NB)                       # ceil; batch is padded, NB never shrunk
    Npad = G * NB

    weights = (packed['sscale'], packed['sbias'], packed['wstem'],
               packed['at'], packed['wbig'], packed['bnsc'], packed['bnsh'],
               packed['pool'], packed['whead'], packed['bhead'])

    # Explicit scoped-VMEM budget (v5e default is only 16 MiB); clamp well under
    # v7x's 64 MiB physical VMEM.
    wbytes = sum(int(w.size) * w.dtype.itemsize for w in weights)
    io_bytes = R * TCin * 4 + NB * TK * 4
    act_bytes = R * (P + 4) * TC * 4            # rough in-kernel intermediates (h, y, acc, s)
    vmem_limit = int(min(max(2 * (wbytes + io_bytes) + act_bytes + (16 << 20),
                             32 << 20), 48 << 20))

    def make_fused(single_buffer_weights):
        def const_spec(shape):
            idx = (lambda g, _n=len(shape): (0,) * _n)
            if single_buffer_weights:
                return pl.BlockSpec(shape, idx, pipeline_mode=pl.Buffered(1))
            return pl.BlockSpec(shape, idx)

        in_specs = [
            pl.BlockSpec((1, R, TCin), lambda g: (g, 0, 0)),        # x block
            const_spec((R, TCin)),                                  # stem scale (f32)
            const_spec((R, TC)),                                    # stem bias, folded (f32)
            const_spec((TCin, TC)),                                 # stem weight (bf16)
            const_spec((L, P, R, R)),                               # block-diag A^T (bf16)
            const_spec((L, TC, P * TC)),                            # kron(lt, W_p) concat (bf16)
            const_spec((L, 1, TC)),                                 # BN scale (f32)
            const_spec((L, 1, TC)),                                 # BN shift (f32)
            const_spec((NB, R)),                                    # pool matrix (f32)
            const_spec((TC, TK)),                                   # head weight (bf16)
            const_spec((1, TK)),                                    # head bias (f32)
        ]
        return pl.pallas_call(
            _stgcn_fused_kernel,
            out_shape=jax.ShapeDtypeStruct((G, NB, TK), jnp.float32),
            grid_spec=pltpu.PrefetchScalarGridSpec(
                num_scalar_prefetch=0,
                grid=(G,),
                in_specs=in_specs,
                out_specs=pl.BlockSpec((1, NB, TK), lambda g: (g, 0, 0)),
            ),
            compiler_params=pltpu.CompilerParams(
                dimension_semantics=("parallel",),
                vmem_limit_bytes=vmem_limit),
        )

    # Prefer single-buffered constant weights (their index_map never changes with g,
    # so double-buffering them only doubles VMEM — matters on v7x's 64 MiB).
    # Probe-compile and fall back if this jax version rejects pipeline_mode here.
    fused = None
    if hasattr(pl, "Buffered"):
        try:
            cand = make_fused(True)
            x_sds = jax.ShapeDtypeStruct((G, R, TCin), jnp.float32)
            w_sds = tuple(jax.ShapeDtypeStruct(w.shape, w.dtype) for w in weights)
            jax.jit(lambda *a: cand(*a)).lower(x_sds, *w_sds).compile()
            fused = cand
        except Exception:
            fused = None
    if fused is None:
        fused = make_fused(False)

    @jax.jit
    def forward(x_nctv):
        # (N, C, T, V) -> (N, V, T, C): rows are (sample, node), cols are (t, c)
        # TODO(synk): this transpose re-reads the input through HBM once; fold it
        # in-kernel for production sizes.
        x2 = jnp.transpose(x_nctv, (0, 3, 2, 1)).reshape(N, V, TCin)
        if Npad != N:                                    # pad batch instead of shrinking NB
            x2 = jnp.pad(x2, ((0, Npad - N), (0, 0), (0, 0)))
        x2 = x2.reshape(G, R, TCin)
        y = fused(x2, *weights)                          # (G, NB, T*K)
        y = y.reshape(Npad, T, K)[:N]                    # drop padded samples
        return jnp.transpose(y, (0, 2, 1))               # (N, K, T)

    return forward


# ----------------------------- parameter init --------------------------------

def init_params(key, cfg):
    V = cfg['num_node']
    P = cfg['num_partitions']
    Cin = cfg['in_feat']
    K = cfg['num_classes']
    keys = iter(jax.random.split(key, 64))

    def nrm(shape, scale=0.1):
        return scale * jax.random.normal(next(keys), shape, dtype=jnp.float32)

    params = {}
    A = jax.random.uniform(next(keys), (P, V, V), dtype=jnp.float32)
    params['A'] = A / jnp.sum(A, axis=-1, keepdims=True)

    params['bn_in'] = dict(
        gamma=1.0 + nrm((V * Cin,)),
        beta=nrm((V * Cin,)),
        mean=nrm((V * Cin,)),
        var=1.0 + 0.1 * jax.random.uniform(next(keys), (V * Cin,), dtype=jnp.float32),
    )
    C0 = cfg['in_ch'][0][0]
    params['fcn_in'] = dict(w=nrm((C0, Cin)), b=nrm((C0,)))

    params['layers'] = []
    for i, Lcnt in enumerate(cfg['layers']):
        for j in range(Lcnt):
            cin, cout = cfg['in_ch'][i][j], cfg['out_ch'][i][j]
            params['layers'].append(dict(
                conv_w=nrm((P, cin, cout)),   # conv_w[p, i, o] == Conv2d.weight[p*cout+o, i, 0, 0]
                bn_gamma=1.0 + nrm((cout,)),
                bn_beta=nrm((cout,)),
                bn_mean=nrm((cout,)),
                bn_var=1.0 + 0.1 * jax.random.uniform(next(keys), (cout,), dtype=jnp.float32),
                importance=jnp.ones((V, V), dtype=jnp.float32),
                kernel=cfg['kernel'][i],
                stride=cfg['stride'][i][j],
                cin=cin, cout=cout,
            ))
    Clast = cfg['out_ch'][-1][-1]
    params['fcn_out'] = dict(w=nrm((K, Clast)), b=nrm((K,)))
    return params


# ----------------------------- pure-JAX reference ----------------------------

def reference_forward(x_nctv, params):
    N, C, T, V = x_nctv.shape
    bn = params['bn_in']
    x = jnp.transpose(x_nctv, (0, 3, 1, 2)).reshape(N, V * C, T)
    x = (x - bn['mean'][None, :, None]) / jnp.sqrt(bn['var'][None, :, None] + EPS)
    x = x * bn['gamma'][None, :, None] + bn['beta'][None, :, None]
    x = x.reshape(N, V, C, T).transpose(0, 2, 3, 1)                 # (N, C, T, V)
    Wf, bf = params['fcn_in']['w'], params['fcn_in']['b']
    x = jnp.einsum('nctv,oc->notv', x, Wf) + bf[None, :, None, None]
    A = params['A']
    for lp in params['layers']:
        Aeff = A * lp['importance'][None]
        lt = make_lt_matrix(T, lp['kernel'], lp['stride'])
        res = x
        y = jnp.einsum('nitv,pio->npotv', x, lp['conv_w'])
        z = jnp.einsum('npotw,pwv->npotv', y, Aeff)
        u = jnp.einsum('npotv,ts->npovs', z, lt)
        s = u.sum(axis=1)                                           # (N, Cout, V, T)
        s = jnp.transpose(s, (0, 1, 3, 2))                          # (N, Cout, T, V)
        s = (s - lp['bn_mean'][None, :, None, None]) / jnp.sqrt(
            lp['bn_var'][None, :, None, None] + EPS)
        s = s * lp['bn_gamma'][None, :, None, None] + lp['bn_beta'][None, :, None, None]
        s = jnp.maximum(s, 0.0)
        x = jnp.maximum(s + res, 0.0)
    pooled = x.mean(axis=3)                                         # (N, C, T)
    Wo, bo = params['fcn_out']['w'], params['fcn_out']['b']
    return jnp.einsum('nct,oc->not', pooled, Wo) + bo[None, :, None]


# ----------------------------- main -------------------------------------------

if __name__ == "__main__":
    cfg = dict(
        in_feat=4, num_classes=8,
        kernel=[3], layers=[2],
        in_ch=[[16, 16]], out_ch=[[16, 16]],
        stride=[[1, 1]], residual=[[1, 1]], dropout=[[0.0, 0.0]],
        importance=True, num_node=16, num_partitions=3,
    )
    key = jax.random.PRNGKey(0)
    kp, kx = jax.random.split(key)
    params = init_params(kp, cfg)

    N, C, T, V = 2, cfg['in_feat'], 8, cfg['num_node']
    x = jax.random.normal(kx, (N, C, T, V), dtype=jnp.float32)

    forward = build_stgcn_forward(params, cfg, T=T, N=N)   # one-time weight packing
    out = jax.block_until_ready(forward(x))

    ref = reference_forward(x, params)
    # bf16 MXU operands with f32 accumulation -> looser tolerance than the pure-f32 kernel
    np.testing.assert_allclose(np.asarray(out), np.asarray(ref), atol=2e-2, rtol=2e-2)
    assert out.shape == (N, cfg['num_classes'], T)
    print("KERNEL_OK")
</pallas_src>

<mosaic_0001>
module attributes {stable_mosaic.version = 11 : i64} {
  func.func @_stgcn_fused_kernel(%arg0: i32, %arg1: memref<1x32x32xf32, #tpu.memory_space<vmem>>, %arg2: memref<32x32xf32, #tpu.memory_space<vmem>>, %arg3: memref<32x128xf32, #tpu.memory_space<vmem>>, %arg4: memref<32x128xbf16, #tpu.memory_space<vmem>>, %arg5: memref<2x3x32x32xbf16, #tpu.memory_space<vmem>>, %arg6: memref<2x128x384xbf16, #tpu.memory_space<vmem>>, %arg7: memref<2x1x128xf32, #tpu.memory_space<vmem>>, %arg8: memref<2x1x128xf32, #tpu.memory_space<vmem>>, %arg9: memref<2x32xf32, #tpu.memory_space<vmem>>, %arg10: memref<128x64xbf16, #tpu.memory_space<vmem>>, %arg11: memref<1x64xf32, #tpu.memory_space<vmem>>, %arg12: memref<1x2x64xf32, #tpu.memory_space<vmem>>) attributes {dimension_semantics = [#tpu.dimension_semantics<parallel>], iteration_bounds = array<i64: 1>, scalar_prefetch = 0 : i64, scratch_operands = 0 : i64, tpu.core_type = #tpu.core_type<tc>, window_params = [{transform_indices = @transform_0, window_bounds = array<i64: 1, 32, 32>}, {pipeline_mode = #tpu.pipeline_mode<synchronous>, transform_indices = @transform_1, window_bounds = array<i64: 32, 32>}, {pipeline_mode = #tpu.pipeline_mode<synchronous>, transform_indices = @transform_2, window_bounds = array<i64: 32, 128>}, {pipeline_mode = #tpu.pipeline_mode<synchronous>, transform_indices = @transform_3, window_bounds = array<i64: 32, 128>}, {pipeline_mode = #tpu.pipeline_mode<synchronous>, transform_indices = @transform_4, window_bounds = array<i64: 2, 3, 32, 32>}, {pipeline_mode = #tpu.pipeline_mode<synchronous>, transform_indices = @transform_5, window_bounds = array<i64: 2, 128, 384>}, {pipeline_mode = #tpu.pipeline_mode<synchronous>, transform_indices = @transform_6, window_bounds = array<i64: 2, 1, 128>}, {pipeline_mode = #tpu.pipeline_mode<synchronous>, transform_indices = @transform_7, window_bounds = array<i64: 2, 1, 128>}, {pipeline_mode = #tpu.pipeline_mode<synchronous>, transform_indices = @transform_8, window_bounds = array<i64: 2, 32>}, {pipeline_mode = #tpu.pipeline_mode<synchronous>, transform_indices = @transform_9, window_bounds = array<i64: 128, 64>}, {pipeline_mode = #tpu.pipeline_mode<synchronous>, transform_indices = @transform_10, window_bounds = array<i64: 1, 64>}, {transform_indices = @transform_11, window_bounds = array<i64: 1, 2, 64>}]} {
    %c0 = arith.constant 0 : index
    %c0_0 = arith.constant 0 : index
    %c0_1 = arith.constant 0 : index
    %0 = vector.load %arg1[%c0, %c0_0, %c0_1] : memref<1x32x32xf32, #tpu.memory_space<vmem>>, vector<1x32x32xf32>
    %1 = vector.shape_cast %0 : vector<1x32x32xf32> to vector<32x32xf32>
    %c0_2 = arith.constant 0 : index
    %c0_3 = arith.constant 0 : index
    %2 = vector.load %arg2[%c0_2, %c0_3] : memref<32x32xf32, #tpu.memory_space<vmem>>, vector<32x32xf32>
    %3 = arith.mulf %1, %2 : vector<32x32xf32>
    %4 = arith.truncf %3 : vector<32x32xf32> to vector<32x32xbf16>
    %c0_4 = arith.constant 0 : index
    %c0_5 = arith.constant 0 : index
    %5 = vector.load %arg4[%c0_4, %c0_5] : memref<32x128xbf16, #tpu.memory_space<vmem>>, vector<32x128xbf16>
    %cst = arith.constant dense<0.000000e+00> : vector<32x128xf32>
    %6 = tpu.matmul %4, %5, %cst {dimension_numbers = #tpu.dot_dimension_numbers<[1], [0], [0], [1], [0, 0, 1, 1], [], []>} : vector<32x32xbf16>, vector<32x128xbf16>, vector<32x128xf32> -> vector<32x128xf32>
    %c0_6 = arith.constant 0 : index
    %c0_7 = arith.constant 0 : index
    %7 = vector.load %arg3[%c0_6, %c0_7] : memref<32x128xf32, #tpu.memory_space<vmem>>, vector<32x128xf32>
    %8 = arith.addf %6, %7 : vector<32x128xf32>
    %9 = arith.truncf %8 : vector<32x128xf32> to vector<32x128xbf16>
    %c0_8 = arith.constant 0 : index
    %c0_9 = arith.constant 0 : index
    %c0_10 = arith.constant 0 : index
    %10 = vector.load %arg6[%c0_8, %c0_9, %c0_10] : memref<2x128x384xbf16, #tpu.memory_space<vmem>>, vector<1x128x384xbf16>
    %11 = vector.shape_cast %10 : vector<1x128x384xbf16> to vector<128x384xbf16>
    %cst_11 = arith.constant dense<0.000000e+00> : vector<32x384xf32>
    %12 = tpu.matmul %9, %11, %cst_11 {dimension_numbers = #tpu.dot_dimension_numbers<[1], [0], [0], [1], [0, 0, 1, 1], [], []>} : vector<32x128xbf16>, vector<128x384xbf16>, vector<32x384xf32> -> vector<32x384xf32>
    %13 = arith.truncf %12 : vector<32x384xf32> to vector<32x384xbf16>
    %c0_12 = arith.constant 0 : index
    %c0_13 = arith.constant 0 : index
    %c0_14 = arith.constant 0 : index
    %c0_15 = arith.constant 0 : index
    %14 = vector.load %arg5[%c0_12, %c0_13, %c0_14, %c0_15] : memref<2x3x32x32xbf16, #tpu.memory_space<vmem>>, vector<1x1x32x32xbf16>
    %15 = vector.shape_cast %14 : vector<1x1x32x32xbf16> to vector<32x32xbf16>
    %16 = vector.extract_strided_slice %13 {offsets = [0, 0], sizes = [32, 128], strides = [1, 1]} : vector<32x384xbf16> to vector<32x128xbf16>
    %cst_16 = arith.constant dense<0.000000e+00> : vector<32x128xf32>
    %17 = tpu.matmul %15, %16, %cst_16 {dimension_numbers = #tpu.dot_dimension_numbers<[1], [0], [0], [1], [0, 0, 1, 1], [], []>} : vector<32x32xbf16>, vector<32x128xbf16>, vector<32x128xf32> -> vector<32x128xf32>
    %c0_17 = arith.constant 0 : index
    %c1 = arith.constant 1 : index
    %c0_18 = arith.constant 0 : index
    %c0_19 = arith.constant 0 : index
    %18 = vector.load %arg5[%c0_17, %c1, %c0_18, %c0_19] : memref<2x3x32x32xbf16, #tpu.memory_space<vmem>>, vector<1x1x32x32xbf16>
    %19 = vector.shape_cast %18 : vector<1x1x32x32xbf16> to vector<32x32xbf16>
    %20 = vector.extract_strided_slice %13 {offsets = [0, 128], sizes = [32, 128], strides = [1, 1]} : vector<32x384xbf16> to vector<32x128xbf16>
    %cst_20 = arith.constant dense<0.000000e+00> : vector<32x128xf32>
    %21 = tpu.matmul %19, %20, %cst_20 {dimension_numbers = #tpu.dot_dimension_numbers<[1], [0], [0], [1], [0, 0, 1, 1], [], []>} : vector<32x32xbf16>, vector<32x128xbf16>, vector<32x128xf32> -> vector<32x128xf32>
    %22 = arith.addf %17, %21 : vector<32x128xf32>
    %c0_21 = arith.constant 0 : index
    %c2 = arith.constant 2 : index
    %c0_22 = arith.constant 0 : index
    %c0_23 = arith.constant 0 : index
    %23 = vector.load %arg5[%c0_21, %c2, %c0_22, %c0_23] : memref<2x3x32x32xbf16, #tpu.memory_space<vmem>>, vector<1x1x32x32xbf16>
    %24 = vector.shape_cast %23 : vector<1x1x32x32xbf16> to vector<32x32xbf16>
    %25 = vector.extract_strided_slice %13 {offsets = [0, 256], sizes = [32, 128], strides = [1, 1]} : vector<32x384xbf16> to vector<32x128xbf16>
    %cst_24 = arith.constant dense<0.000000e+00> : vector<32x128xf32>
    %26 = tpu.matmul %24, %25, %cst_24 {dimension_numbers = #tpu.dot_dimension_numbers<[1], [0], [0], [1], [0, 0, 1, 1], [], []>} : vector<32x32xbf16>, vector<32x128xbf16>, vector<32x128xf32> -> vector<32x128xf32>
    %27 = arith.addf %22, %26 : vector<32x128xf32>
    %c0_25 = arith.constant 0 : index
    %c0_26 = arith.constant 0 : index
    %c0_27 = arith.constant 0 : index
    %28 = vector.load %arg7[%c0_25, %c0_26, %c0_27] : memref<2x1x128xf32, #tpu.memory_space<vmem>>, vector<1x1x128xf32>
    %29 = vector.shape_cast %28 : vector<1x1x128xf32> to vector<1x128xf32>
    %30 = vector.broadcast %29 : vector<1x128xf32> to vector<32x128xf32>
    %31 = arith.mulf %27, %30 : vector<32x128xf32>
    %c0_28 = arith.constant 0 : index
    %c0_29 = arith.constant 0 : index
    %c0_30 = arith.constant 0 : index
    %32 = vector.load %arg8[%c0_28, %c0_29, %c0_30] : memref<2x1x128xf32, #tpu.memory_space<vmem>>, vector<1x1x128xf32>
    %33 = vector.shape_cast %32 : vector<1x1x128xf32> to vector<1x128xf32>
    %34 = vector.broadcast %33 : vector<1x128xf32> to vector<32x128xf32>
    %35 = arith.addf %31, %34 : vector<32x128xf32>
    %cst_31 = arith.constant 0.000000e+00 : f32
    %36 = vector.broadcast %cst_31 : f32 to vector<32x128xf32>
    %37 = arith.maximumf %35, %36 : vector<32x128xf32>
    %38 = arith.addf %37, %8 : vector<32x128xf32>
    %cst_32 = arith.constant 0.000000e+00 : f32
    %39 = vector.broadcast %cst_32 : f32 to vector<32x128xf32>
    %40 = arith.maximumf %38, %39 : vector<32x128xf32>
    %41 = arith.truncf %40 : vector<32x128xf32> to vector<32x128xbf16>
    %c1_33 = arith.constant 1 : index
    %c0_34 = arith.constant 0 : index
    %c0_35 = arith.constant 0 : index
    %42 = vector.load %arg6[%c1_33, %c0_34, %c0_35] : memref<2x128x384xbf16, #tpu.memory_space<vmem>>, vector<1x128x384xbf16>
    %43 = vector.shape_cast %42 : vector<1x128x384xbf16> to vector<128x384xbf16>
    %cst_36 = arith.constant dense<0.000000e+00> : vector<32x384xf32>
    %44 = tpu.matmul %41, %43, %cst_36 {dimension_numbers = #tpu.dot_dimension_numbers<[1], [0], [0], [1], [0, 0, 1, 1], [], []>} : vector<32x128xbf16>, vector<128x384xbf16>, vector<32x384xf32> -> vector<32x384xf32>
    %45 = arith.truncf %44 : vector<32x384xf32> to vector<32x384xbf16>
    %c1_37 = arith.constant 1 : index
    %c0_38 = arith.constant 0 : index
    %c0_39 = arith.constant 0 : index
    %c0_40 = arith.constant 0 : index
    %46 = vector.load %arg5[%c1_37, %c0_38, %c0_39, %c0_40] : memref<2x3x32x32xbf16, #tpu.memory_space<vmem>>, vector<1x1x32x32xbf16>
    %47 = vector.shape_cast %46 : vector<1x1x32x32xbf16> to vector<32x32xbf16>
    %48 = vector.extract_strided_slice %45 {offsets = [0, 0], sizes = [32, 128], strides = [1, 1]} : vector<32x384xbf16> to vector<32x128xbf16>
    %cst_41 = arith.constant dense<0.000000e+00> : vector<32x128xf32>
    %49 = tpu.matmul %47, %48, %cst_41 {dimension_numbers = #tpu.dot_dimension_numbers<[1], [0], [0], [1], [0, 0, 1, 1], [], []>} : vector<32x32xbf16>, vector<32x128xbf16>, vector<32x128xf32> -> vector<32x128xf32>
    %c1_42 = arith.constant 1 : index
    %c1_43 = arith.constant 1 : index
    %c0_44 = arith.constant 0 : index
    %c0_45 = arith.constant 0 : index
    %50 = vector.load %arg5[%c1_42, %c1_43, %c0_44, %c0_45] : memref<2x3x32x32xbf16, #tpu.memory_space<vmem>>, vector<1x1x32x32xbf16>
    %51 = vector.shape_cast %50 : vector<1x1x32x32xbf16> to vector<32x32xbf16>
    %52 = vector.extract_strided_slice %45 {offsets = [0, 128], sizes = [32, 128], strides = [1, 1]} : vector<32x384xbf16> to vector<32x128xbf16>
    %cst_46 = arith.constant dense<0.000000e+00> : vector<32x128xf32>
    %53 = tpu.matmul %51, %52, %cst_46 {dimension_numbers = #tpu.dot_dimension_numbers<[1], [0], [0], [1], [0, 0, 1, 1], [], []>} : vector<32x32xbf16>, vector<32x128xbf16>, vector<32x128xf32> -> vector<32x128xf32>
    %54 = arith.addf %49, %53 : vector<32x128xf32>
    %c1_47 = arith.constant 1 : index
    %c2_48 = arith.constant 2 : index
    %c0_49 = arith.constant 0 : index
    %c0_50 = arith.constant 0 : index
    %55 = vector.load %arg5[%c1_47, %c2_48, %c0_49, %c0_50] : memref<2x3x32x32xbf16, #tpu.memory_space<vmem>>, vector<1x1x32x32xbf16>
    %56 = vector.shape_cast %55 : vector<1x1x32x32xbf16> to vector<32x32xbf16>
    %57 = vector.extract_strided_slice %45 {offsets = [0, 256], sizes = [32, 128], strides = [1, 1]} : vector<32x384xbf16> to vector<32x128xbf16>
    %cst_51 = arith.constant dense<0.000000e+00> : vector<32x128xf32>
    %58 = tpu.matmul %56, %57, %cst_51 {dimension_numbers = #tpu.dot_dimension_numbers<[1], [0], [0], [1], [0, 0, 1, 1], [], []>} : vector<32x32xbf16>, vector<32x128xbf16>, vector<32x128xf32> -> vector<32x128xf32>
    %59 = arith.addf %54, %58 : vector<32x128xf32>
    %c1_52 = arith.constant 1 : index
    %c0_53 = arith.constant 0 : index
    %c0_54 = arith.constant 0 : index
    %60 = vector.load %arg7[%c1_52, %c0_53, %c0_54] : memref<2x1x128xf32, #tpu.memory_space<vmem>>, vector<1x1x128xf32>
    %61 = vector.shape_cast %60 : vector<1x1x128xf32> to vector<1x128xf32>
    %62 = vector.broadcast %61 : vector<1x128xf32> to vector<32x128xf32>
    %63 = arith.mulf %59, %62 : vector<32x128xf32>
    %c1_55 = arith.constant 1 : index
    %c0_56 = arith.constant 0 : index
    %c0_57 = arith.constant 0 : index
    %64 = vector.load %arg8[%c1_55, %c0_56, %c0_57] : memref<2x1x128xf32, #tpu.memory_space<vmem>>, vector<1x1x128xf32>
    %65 = vector.shape_cast %64 : vector<1x1x128xf32> to vector<1x128xf32>
    %66 = vector.broadcast %65 : vector<1x128xf32> to vector<32x128xf32>
    %67 = arith.addf %63, %66 : vector<32x128xf32>
    %cst_58 = arith.constant 0.000000e+00 : f32
    %68 = vector.broadcast %cst_58 : f32 to vector<32x128xf32>
    %69 = arith.maximumf %67, %68 : vector<32x128xf32>
    %70 = arith.addf %69, %40 : vector<32x128xf32>
    %cst_59 = arith.constant 0.000000e+00 : f32
    %71 = vector.broadcast %cst_59 : f32 to vector<32x128xf32>
    %72 = arith.maximumf %70, %71 : vector<32x128xf32>
    %c0_60 = arith.constant 0 : index
    %c0_61 = arith.constant 0 : index
    %73 = vector.load %arg9[%c0_60, %c0_61] : memref<2x32xf32, #tpu.memory_space<vmem>>, vector<2x32xf32>
    %cst_62 = arith.constant dense<0.000000e+00> : vector<2x128xf32>
    %74 = tpu.matmul %73, %72, %cst_62 {dimension_numbers = #tpu.dot_dimension_numbers<[1], [0], [0], [1], [0, 0, 1, 1], [], []>} : vector<2x32xf32>, vector<32x128xf32>, vector<2x128xf32> -> vector<2x128xf32>
    %75 = arith.truncf %74 : vector<2x128xf32> to vector<2x128xbf16>
    %c0_63 = arith.constant 0 : index
    %c0_64 = arith.constant 0 : index
    %76 = vector.load %arg10[%c0_63, %c0_64] : memref<128x64xbf16, #tpu.memory_space<vmem>>, vector<128x64xbf16>
    %cst_65 = arith.constant dense<0.000000e+00> : vector<2x64xf32>
    %77 = tpu.matmul %75, %76, %cst_65 {dimension_numbers = #tpu.dot_dimension_numbers<[1], [0], [0], [1], [0, 0, 1, 1], [], []>} : vector<2x128xbf16>, vector<128x64xbf16>, vector<2x64xf32> -> vector<2x64xf32>
    %c0_66 = arith.constant 0 : index
    %c0_67 = arith.constant 0 : index
    %78 = vector.load %arg11[%c0_66, %c0_67] : memref<1x64xf32, #tpu.memory_space<vmem>>, vector<1x64xf32>
    %79 = vector.broadcast %78 : vector<1x64xf32> to vector<2x64xf32>
    %80 = arith.addf %77, %79 : vector<2x64xf32>
    %c0_68 = arith.constant 0 : index
    %c0_69 = arith.constant 0 : index
    %c0_70 = arith.constant 0 : index
    %81 = vector.load %arg12[%c0_68, %c0_69, %c0_70] : memref<1x2x64xf32, #tpu.memory_space<vmem>>, vector<1x2x64xf32>
    %82 = vector.shape_cast %81 : vector<1x2x64xf32> to vector<2x64xf32>
    %83 = vector.shape_cast %80 : vector<2x64xf32> to vector<1x2x64xf32>
    tpu.vector_store %arg12[%c0_68, %c0_69, %c0_70], %83 {strides = array<i32>} : memref<1x2x64xf32, #tpu.memory_space<vmem>>, vector<1x2x64xf32>,
    return
  }
  func.func @transform_0(%arg0: i32) -> (i32, i32, i32) {
    %c0_i32 = arith.constant 0 : i32
    %c0_i32_0 = arith.constant 0 : i32
    %c0_i32_1 = arith.constant 0 : i32
    return %arg0, %c0_i32, %c0_i32_0 : i32, i32, i32
  }
  func.func @transform_1(%arg0: i32) -> (i32, i32) {
    %c0_i32 = arith.constant 0 : i32
    %c0_i32_0 = arith.constant 0 : i32
    %c0_i32_1 = arith.constant 0 : i32
    return %c0_i32, %c0_i32_0 : i32, i32
  }
  func.func @transform_2(%arg0: i32) -> (i32, i32) {
    %c0_i32 = arith.constant 0 : i32
    %c0_i32_0 = arith.constant 0 : i32
    %c0_i32_1 = arith.constant 0 : i32
    return %c0_i32, %c0_i32_0 : i32, i32
  }
  func.func @transform_3(%arg0: i32) -> (i32, i32) {
    %c0_i32 = arith.constant 0 : i32
    %c0_i32_0 = arith.constant 0 : i32
    %c0_i32_1 = arith.constant 0 : i32
    return %c0_i32, %c0_i32_0 : i32, i32
  }
  func.func @transform_4(%arg0: i32) -> (i32, i32, i32, i32) {
    %c0_i32 = arith.constant 0 : i32
    %c0_i32_0 = arith.constant 0 : i32
    %c0_i32_1 = arith.constant 0 : i32
    %c0_i32_2 = arith.constant 0 : i32
    %c0_i32_3 = arith.constant 0 : i32
    return %c0_i32, %c0_i32_0, %c0_i32_1, %c0_i32_2 : i32, i32, i32, i32
  }
  func.func @transform_5(%arg0: i32) -> (i32, i32, i32) {
    %c0_i32 = arith.constant 0 : i32
    %c0_i32_0 = arith.constant 0 : i32
    %c0_i32_1 = arith.constant 0 : i32
    %c0_i32_2 = arith.constant 0 : i32
    return %c0_i32, %c0_i32_0, %c0_i32_1 : i32, i32, i32
  }
  func.func @transform_6(%arg0: i32) -> (i32, i32, i32) {
    %c0_i32 = arith.constant 0 : i32
    %c0_i32_0 = arith.constant 0 : i32
    %c0_i32_1 = arith.constant 0 : i32
    %c0_i32_2 = arith.constant 0 : i32
    return %c0_i32, %c0_i32_0, %c0_i32_1 : i32, i32, i32
  }
  func.func @transform_7(%arg0: i32) -> (i32, i32, i32) {
    %c0_i32 = arith.constant 0 : i32
    %c0_i32_0 = arith.constant 0 : i32
    %c0_i32_1 = arith.constant 0 : i32
    %c0_i32_2 = arith.constant 0 : i32
    return %c0_i32, %c0_i32_0, %c0_i32_1 : i32, i32, i32
  }
  func.func @transform_8(%arg0: i32) -> (i32, i32) {
    %c0_i32 = arith.constant 0 : i32
    %c0_i32_0 = arith.constant 0 : i32
    %c0_i32_1 = arith.constant 0 : i32
    return %c0_i32, %c0_i32_0 : i32, i32
  }
  func.func @transform_9(%arg0: i32) -> (i32, i32) {
    %c0_i32 = arith.constant 0 : i32
    %c0_i32_0 = arith.constant 0 : i32
    %c0_i32_1 = arith.constant 0 : i32
    return %c0_i32, %c0_i32_0 : i32, i32
  }
  func.func @transform_10(%arg0: i32) -> (i32, i32) {
    %c0_i32 = arith.constant 0 : i32
    %c0_i32_0 = arith.constant 0 : i32
    %c0_i32_1 = arith.constant 0 : i32
    return %c0_i32, %c0_i32_0 : i32, i32
  }
  func.func @transform_11(%arg0: i32) -> (i32, i32, i32) {
    %c0_i32 = arith.constant 0 : i32
    %c0_i32_0 = arith.constant 0 : i32
    %c0_i32_1 = arith.constant 0 : i32
    return %arg0, %c0_i32, %c0_i32_0 : i32, i32, i32
  }
}

</mosaic_0001>

<llo_original>
// kernel: forward.1
$region0: #{forward.1}
  #allocation0 [shape = 'u32[]', space=smem, size = 0x4, offset = 0x4, fixed_abs, tag = 'smem constant byte address 0x4 - core index']
  #allocation1 [shape = 'u32[144,128]{1,0:T(1,128)}', space=vmem, size = 0x12000, scoped, tag = 'internal scratch']
  %s0 = inlined_call_operand.vmem [shape: f32[1,32,32], index: 0, kind: input, shape index: {}]
  %s1 = inlined_call_operand.vmem [shape: f32[32,32], index: 1, kind: input, shape index: {}]
  %s2 = inlined_call_operand.vmem [shape: f32[32,128], index: 2, kind: input, shape index: {}]
  %s3 = inlined_call_operand.vmem [shape: bf16[32,128], index: 3, kind: input, shape index: {}]
  %s4 = inlined_call_operand.vmem [shape: bf16[2,3,32,32], index: 4, kind: input, shape index: {}]
  %s5 = inlined_call_operand.vmem [shape: bf16[2,128,384], index: 5, kind: input, shape index: {}]
  %s6 = inlined_call_operand.vmem [shape: f32[2,1,128], index: 6, kind: input, shape index: {}]
  %s7 = inlined_call_operand.vmem [shape: f32[2,1,128], index: 7, kind: input, shape index: {}]
  %s8 = inlined_call_operand.vmem [shape: f32[2,32], index: 8, kind: input, shape index: {}]
  %s9 = inlined_call_operand.vmem [shape: bf16[128,64], index: 9, kind: input, shape index: {}]
  %s10 = inlined_call_operand.vmem [shape: f32[1,64], index: 10, kind: input, shape index: {}]
  %s11 = inlined_call_operand.vmem [shape: f32[1,2,64], index: 11, kind: output, shape index: {}]
  %s12 = sld [smem:[#allocation0]]
  $region54: #{forward.1} parent=0
    _
  %s14 = ssub.s32 1, %s12
  %s15 = scalar_select 0, %s14, %s12
  // Predicated region
  $region2: #{forward.1} parent=0 // pred_check
    _
  $region3: #{forward.1} parent=0 // pred_check_branch
    %17 = sbr.rel (0) target = $region5
  $region4: #{forward.1} parent=0 // pred_region
    _
  $region5: #{forward.1} parent=0 // pred_fallthru
    _
  // Predicated region
  $region6: #{forward.1} parent=0 // pred_check
    _
  $region7: #{forward.1} parent=0 // pred_check_branch
    %19 = sbr.rel (0) target = $region9
  $region8: #{forward.1} parent=0 // pred_region
    _
  $region9: #{forward.1} parent=0 // pred_fallthru
    _
  // Predicated region
  $region10: #{forward.1} parent=0 // pred_check
    _
  $region11: #{forward.1} parent=0 // pred_check_branch
    %21 = sbr.rel (0) target = $region13
  $region12: #{forward.1} parent=0 // pred_region
    _
  $region13: #{forward.1} parent=0 // pred_fallthru
    _
  // Predicated region
  $region14: #{forward.1} parent=0 // pred_check
    _
  $region15: #{forward.1} parent=0 // pred_check_branch
    %23 = sbr.rel (0) target = $region17
  $region16: #{forward.1} parent=0 // pred_region
    _
  $region17: #{forward.1} parent=0 // pred_fallthru
    _
  // Predicated region
  $region18: #{forward.1} parent=0 // pred_check
    _
  $region19: #{forward.1} parent=0 // pred_check_branch
    %25 = sbr.rel (0) target = $region21
  $region20: #{forward.1} parent=0 // pred_region
    _
  $region21: #{forward.1} parent=0 // pred_fallthru
    _
  // Predicated region
  $region22: #{forward.1} parent=0 // pred_check
    _
  $region23: #{forward.1} parent=0 // pred_check_branch
    %27 = sbr.rel (0) target = $region25
  $region24: #{forward.1} parent=0 // pred_region
    _
  $region25: #{forward.1} parent=0 // pred_fallthru
    _
  // Predicated region
  $region26: #{forward.1} parent=0 // pred_check
    _
  $region27: #{forward.1} parent=0 // pred_check_branch
    %29 = sbr.rel (0) target = $region29
  $region28: #{forward.1} parent=0 // pred_region
    _
  $region29: #{forward.1} parent=0 // pred_fallthru
    _
  // Predicated region
  $region30: #{forward.1} parent=0 // pred_check
    _
  $region31: #{forward.1} parent=0 // pred_check_branch
    %31 = sbr.rel (0) target = $region33
  $region32: #{forward.1} parent=0 // pred_region
    _
  $region33: #{forward.1} parent=0 // pred_fallthru
    _
  // Predicated region
  $region34: #{forward.1} parent=0 // pred_check
    _
  $region35: #{forward.1} parent=0 // pred_check_branch
    %33 = sbr.rel (0) target = $region37
  $region36: #{forward.1} parent=0 // pred_region
    _
  $region37: #{forward.1} parent=0 // pred_fallthru
    _
  // Predicated region
  $region38: #{forward.1} parent=0 // pred_check
    _
  $region39: #{forward.1} parent=0 // pred_check_branch
    %35 = sbr.rel (0) target = $region41
  $region40: #{forward.1} parent=0 // pred_region
    _
  $region41: #{forward.1} parent=0 // pred_fallthru
    _
  // Predicated region
  $region42: #{forward.1} parent=0 // pred_check
    _
  $region43: #{forward.1} parent=0 // pred_check_branch
    %37 = sbr.rel (0) target = $region45
  $region44: #{forward.1} parent=0 // pred_region
    _
  $region45: #{forward.1} parent=0 // pred_fallthru
    _
  %v39 = vld [vmem:[%s0] sm:$0xff]
  %v40 = vld [vmem:[%s0 + $0x8] sm:$0xff]
  %v41 = vld [vmem:[%s0 + $0x10] sm:$0xff]
  %v42 = vld [vmem:[%s0 + $0x18] sm:$0xff]
  %v43 = vld [vmem:[%s1] sm:$0xff]
  %v44 = vld [vmem:[%s1 + $0x8] sm:$0xff]
  %v45 = vld [vmem:[%s1 + $0x10] sm:$0xff]
  %v46 = vld [vmem:[%s1 + $0x18] sm:$0xff]
  %v47 = vmul.f32 %v39, %v43
  %v48 = vmul.f32 %v40, %v44
  %v49 = vmul.f32 %v41, %v45
  %v50 = vmul.f32 %v42, %v46
  %v51 = vpack.c.bf16 %v48, %v47
  %v52 = vpack.c.bf16 %v50, %v49
  %v53 = vld [vmem:[%s3] sm:$0xf]
  %v54 = vld [vmem:[%s3 + $0x4] sm:$0xf]
  %v55 = vld [vmem:[%s3 + $0x8] sm:$0xf]
  %v56 = vld [vmem:[%s3 + $0xc] sm:$0xf]
  %v57 = vld [vmem:[%s2] sm:$0xff]
  %v58 = vld [vmem:[%s2 + $0x8] sm:$0xff]
  %v59 = vld [vmem:[%s2 + $0x10] sm:$0xff]
  %v60 = vld [vmem:[%s2 + $0x18] sm:$0xff]
  %v65 = vunpack.c.l.b16 %v53
  %v66 = vunpack.c.l.b16 %v54
  %v67 = vunpack.c.l.b16 %v55
  %v68 = vunpack.c.l.b16 %v56
  %v69 = vpack.c.b16 %v66, %v65
  %v70 = vpack.c.b16 %v68, %v67
  %vm73 = vcmask 261120
  %v75 = vsel %vm73, %v51, 0
  %v78 = vsel %vm73, %v52, 0
  %80 = vmatprep.subr.bf16.mxu0 0
  %81 = vmatpush1.bf16.msra.mxu0 %v69
  %82 = vmatprep.subr.bf16.mxu0 0
  %83 = vmatpush1.bf16.msra.mxu0 %v70
  %84 = vmatprep.subr.bf16.mxu0 0
  %85 = vmatpush1.bf16.msra.mxu0 0
  %86 = vmatprep.subr.bf16.mxu0 0
  %87 = vmatpush1.bf16.msra.mxu0 0
  %88 = vmatprep.subr.bf16.mxu0 0
  %89 = vmatpush1.bf16.msra.mxu0 0
  %90 = vmatprep.subr.bf16.mxu0 0
  %91 = vmatpush1.bf16.msra.mxu0 0
  %92 = vmatprep.subr.bf16.mxu0 0
  %93 = vmatpush1.bf16.msra.mxu0 0
  %94 = vmatprep.subr.bf16.mxu0 0
  %95 = vmatpush1.bf16.msra.mxu0 0
  %96 = vmatprep.subr.bf16.mxu0 0
  %97 = vmatpush1.bf16.msra.mxu0 0
  %98 = vmatprep.subr.bf16.mxu0 0
  %99 = vmatpush1.bf16.msra.mxu0 0
  %100 = vmatprep.subr.bf16.mxu0 0
  %101 = vmatpush1.bf16.msra.mxu0 0
  %102 = vmatprep.subr.bf16.mxu0 0
  %103 = vmatpush1.bf16.msra.mxu0 0
  %104 = vmatprep.subr.bf16.mxu0 0
  %105 = vmatpush1.bf16.msra.mxu0 0
  %106 = vmatprep.subr.bf16.mxu0 0
  %107 = vmatpush1.bf16.msra.mxu0 0
  %108 = vmatprep.subr.bf16.mxu0 0
  %109 = vmatpush1.bf16.msra.mxu0 0
  %110 = vmatprep.subr.bf16.mxu0 0
  %111 = vmatpush1.bf16.msra.mxu0 0
  %112 = vmatprep.mubr.bf16.mxu0 0
  %113 = vmatmul.mubr.bf16.gmra.mrb[0].mxu0 %v75
  %v114 = vpop.f32.mrb[0].mxu0
  %v115 = vadd.f32 %v57, %v114
  %v116 = vpop.f32.mrb[0].mxu0
  %v117 = vpop.f32.mrb[0].mxu0
  %v118 = vadd.f32 %v58, %v117
  %v119 = vpop.f32.mrb[0].mxu0
  %120 = vmatprep.mubr.bf16.mxu0 0
  %121 = vmatmul.mubr.bf16.gmra.mrb[0].mxu0 %v78
  %v122 = vpop.f32.mrb[0].mxu0
  %v123 = vadd.f32 %v59, %v122
  %v124 = vpop.f32.mrb[0].mxu0
  %v125 = vpop.f32.mrb[0].mxu0
  %v126 = vadd.f32 %v60, %v125
  %v127 = vpop.f32.mrb[0].mxu0
  %128 = vdwg.mxu0
  %v129 = vpack.c.bf16 %v118, %v115
  %v130 = vpack.c.bf16 %v126, %v123
  %v131 = vld [vmem:[%s5] sm:$0xff]
  %v132 = vld [vmem:[%s5 + $0x8] sm:$0xf]
  %v133 = vld [vmem:[%s5 + $0xc] sm:$0xff]
  %v134 = vld [vmem:[%s5 + $0x14] sm:$0xf]
  %v135 = vld [vmem:[%s5 + $0x18] sm:$0xff]
  %v136 = vld [vmem:[%s5 + $0x20] sm:$0xf]
  %v137 = vld [vmem:[%s5 + $0x24] sm:$0xff]
  %v138 = vld [vmem:[%s5 + $0x2c] sm:$0xf]
  %v139 = vld [vmem:[%s5 + $0x30] sm:$0xff]
  %v140 = vld [vmem:[%s5 + $0x38] sm:$0xf]
  %v141 = vld [vmem:[%s5 + $0x3c] sm:$0xff]
  %v142 = vld [vmem:[%s5 + $0x44] sm:$0xf]
  %v143 = vld [vmem:[%s5 + $0x48] sm:$0xff]
  %v144 = vld [vmem:[%s5 + $0x50] sm:$0xf]
  %v145 = vld [vmem:[%s5 + $0x54] sm:$0xff]
  %v146 = vld [vmem:[%s5 + $0x5c] sm:$0xf]
  %v147 = vld [vmem:[%s5 + $0x60] sm:$0xff]
  %v148 = vld [vmem:[%s5 + $0x68] sm:$0xf]
  %v149 = vld [vmem:[%s5 + $0x6c] sm:$0xff]
  %v150 = vld [vmem:[%s5 + $0x74] sm:$0xf]
  %v151 = vld [vmem:[%s5 + $0x78] sm:$0xff]
  %v152 = vld [vmem:[%s5 + $0x80] sm:$0xf]
  %v153 = vld [vmem:[%s5 + $0x84] sm:$0xff]
  %v154 = vld [vmem:[%s5 + $0x8c] sm:$0xf]
  %v155 = vld [vmem:[%s5 + $0x90] sm:$0xff]
  %v156 = vld [vmem:[%s5 + $0x98] sm:$0xf]
  %v157 = vld [vmem:[%s5 + $0x9c] sm:$0xff]
  %v158 = vld [vmem:[%s5 + $0xa4] sm:$0xf]
  %v159 = vld [vmem:[%s5 + $0xa8] sm:$0xff]
  %v160 = vld [vmem:[%s5 + $0xb0] sm:$0xf]
  %v161 = vld [vmem:[%s5 + $0xb4] sm:$0xff]
  %v162 = vld [vmem:[%s5 + $0xbc] sm:$0xf]
  %v195 = vunpack.c.l.b16 %v131
  %v196 = vunpack.c.h.b16 %v131
  %v197 = vunpack.c.l.b16 %v132
  %v198 = vunpack.c.l.b16 %v133
  %v199 = vunpack.c.h.b16 %v133
  %v200 = vunpack.c.l.b16 %v134
  %v201 = vunpack.c.l.b16 %v135
  %v202 = vunpack.c.h.b16 %v135
  %v203 = vunpack.c.l.b16 %v136
  %v204 = vunpack.c.l.b16 %v137
  %v205 = vunpack.c.h.b16 %v137
  %v206 = vunpack.c.l.b16 %v138
  %v207 = vunpack.c.l.b16 %v139
  %v208 = vunpack.c.h.b16 %v139
  %v209 = vunpack.c.l.b16 %v140
  %v210 = vunpack.c.l.b16 %v141
  %v211 = vunpack.c.h.b16 %v141
  %v212 = vunpack.c.l.b16 %v142
  %v213 = vunpack.c.l.b16 %v143
  %v214 = vunpack.c.h.b16 %v143
  %v215 = vunpack.c.l.b16 %v144
  %v216 = vunpack.c.l.b16 %v145
  %v217 = vunpack.c.h.b16 %v145
  %v218 = vunpack.c.l.b16 %v146
  %v219 = vunpack.c.l.b16 %v147
  %v220 = vunpack.c.h.b16 %v147
  %v221 = vunpack.c.l.b16 %v148
  %v222 = vunpack.c.l.b16 %v149
  %v223 = vunpack.c.h.b16 %v149
  %v224 = vunpack.c.l.b16 %v150
  %v225 = vunpack.c.l.b16 %v151
  %v226 = vunpack.c.h.b16 %v151
  %v227 = vunpack.c.l.b16 %v152
  %v228 = vunpack.c.l.b16 %v153
  %v229 = vunpack.c.h.b16 %v153
  %v230 = vunpack.c.l.b16 %v154
  %v231 = vunpack.c.l.b16 %v155
  %v232 = vunpack.c.h.b16 %v155
  %v233 = vunpack.c.l.b16 %v156
  %v234 = vunpack.c.l.b16 %v157
  %v235 = vunpack.c.h.b16 %v157
  %v236 = vunpack.c.l.b16 %v158
  %v237 = vunpack.c.l.b16 %v159
  %v238 = vunpack.c.h.b16 %v159
  %v239 = vunpack.c.l.b16 %v160
  %v240 = vunpack.c.l.b16 %v161
  %v241 = vunpack.c.h.b16 %v161
  %v242 = vunpack.c.l.b16 %v162
  %v243 = vpack.c.b16 %v198, %v195
  %v244 = vpack.c.b16 %v199, %v196
  %v245 = vpack.c.b16 %v200, %v197
  %v246 = vpack.c.b16 %v204, %v201
  %v247 = vpack.c.b16 %v205, %v202
  %v248 = vpack.c.b16 %v206, %v203
  %v249 = vpack.c.b16 %v210, %v207
  %v250 = vpack.c.b16 %v211, %v208
  %v251 = vpack.c.b16 %v212, %v209
  %v252 = vpack.c.b16 %v216, %v213
  %v253 = vpack.c.b16 %v217, %v214
  %v254 = vpack.c.b16 %v218, %v215
  %v255 = vpack.c.b16 %v222, %v219
  %v256 = vpack.c.b16 %v223, %v220
  %v257 = vpack.c.b16 %v224, %v221
  %v258 = vpack.c.b16 %v228, %v225
  %v259 = vpack.c.b16 %v229, %v226
  %v260 = vpack.c.b16 %v230, %v227
  %v261 = vpack.c.b16 %v234, %v231
  %v262 = vpack.c.b16 %v235, %v232
  %v263 = vpack.c.b16 %v236, %v233
  %v264 = vpack.c.b16 %v240, %v237
  %v265 = vpack.c.b16 %v241, %v238
  %v266 = vpack.c.b16 %v242, %v239
  %291 = vmatprep.subr.bf16.mxu0 %v244
  %292 = vmatpush1.bf16.msra.mxu0 %v243
  %293 = vmatprep.subr.bf16.mxu0 %v247
  %294 = vmatpush1.bf16.msra.mxu0 %v246
  %295 = vmatprep.subr.bf16.mxu0 %v250
  %296 = vmatpush1.bf16.msra.mxu0 %v249
  %297 = vmatprep.subr.bf16.mxu0 %v253
  %298 = vmatpush1.bf16.msra.mxu0 %v252
  %299 = vmatprep.subr.bf16.mxu0 %v256
  %300 = vmatpush1.bf16.msra.mxu0 %v255
  %301 = vmatprep.subr.bf16.mxu0 %v259
  %302 = vmatpush1.bf16.msra.mxu0 %v258
  %303 = vmatprep.subr.bf16.mxu0 %v262
  %304 = vmatpush1.bf16.msra.mxu0 %v261
  %305 = vmatprep.subr.bf16.mxu0 %v265
  %306 = vmatpush1.bf16.msra.mxu0 %v264
  %307 = vmatprep.subr.bf16.mxu0 0
  %308 = vmatpush1.bf16.msra.mxu0 0
  %309 = vmatprep.subr.bf16.mxu0 0
  %310 = vmatpush1.bf16.msra.mxu0 0
  %311 = vmatprep.subr.bf16.mxu0 0
  %312 = vmatpush1.bf16.msra.mxu0 0
  %313 = vmatprep.subr.bf16.mxu0 0
  %314 = vmatpush1.bf16.msra.mxu0 0
  %315 = vmatprep.subr.bf16.mxu0 0
  %316 = vmatpush1.bf16.msra.mxu0 0
  %317 = vmatprep.subr.bf16.mxu0 0
  %318 = vmatpush1.bf16.msra.mxu0 0
  %319 = vmatprep.subr.bf16.mxu0 0
  %320 = vmatpush1.bf16.msra.mxu0 0
  %321 = vmatprep.subr.bf16.mxu0 0
  %322 = vmatpush1.bf16.msra.mxu0 0
  %323 = vmatprep.mubr.bf16.mxu0 0
  %324 = vmatmul.mubr.bf16.gmra.mrb[0].mxu0 %v129
  %v325 = vpop.f32.mrb[0].mxu0
  %v326 = vadd.f32 0.0, %v325
  %v327 = vpop.f32.mrb[0].mxu0
  %v328 = vadd.f32 0.0, %v327
  %v329 = vpop.f32.mrb[0].mxu0
  %v330 = vadd.f32 0.0, %v329
  %v331 = vpop.f32.mrb[0].mxu0
  %v332 = vadd.f32 0.0, %v331
  %333 = vmatprep.mubr.bf16.mxu0 0
  %334 = vmatmul.mubr.bf16.gmra.mrb[0].mxu0 %v130
  %v335 = vpop.f32.mrb[0].mxu0
  %v336 = vadd.f32 0.0, %v335
  %v337 = vpop.f32.mrb[0].mxu0
  %v338 = vadd.f32 0.0, %v337
  %v339 = vpop.f32.mrb[0].mxu0
  %v340 = vadd.f32 0.0, %v339
  %v341 = vpop.f32.mrb[0].mxu0
  %v342 = vadd.f32 0.0, %v341
  %343 = vdwg.mxu0
  %344 = vmatprep.subr.bf16.mxu0 0
  %345 = vmatpush1.bf16.msra.mxu0 %v245
  %346 = vmatprep.subr.bf16.mxu0 0
  %347 = vmatpush1.bf16.msra.mxu0 %v248
  %348 = vmatprep.subr.bf16.mxu0 0
  %349 = vmatpush1.bf16.msra.mxu0 %v251
  %350 = vmatprep.subr.bf16.mxu0 0
  %351 = vmatpush1.bf16.msra.mxu0 %v254
  %352 = vmatprep.subr.bf16.mxu0 0
  %353 = vmatpush1.bf16.msra.mxu0 %v257
  %354 = vmatprep.subr.bf16.mxu0 0
  %355 = vmatpush1.bf16.msra.mxu0 %v260
  %356 = vmatprep.subr.bf16.mxu0 0
  %357 = vmatpush1.bf16.msra.mxu0 %v263
  %358 = vmatprep.subr.bf16.mxu0 0
  %359 = vmatpush1.bf16.msra.mxu0 %v266
  %360 = vmatprep.subr.bf16.mxu0 0
  %361 = vmatpush1.bf16.msra.mxu0 0
  %362 = vmatprep.subr.bf16.mxu0 0
  %363 = vmatpush1.bf16.msra.mxu0 0
  %364 = vmatprep.subr.bf16.mxu0 0
  %365 = vmatpush1.bf16.msra.mxu0 0
  %366 = vmatprep.subr.bf16.mxu0 0
  %367 = vmatpush1.bf16.msra.mxu0 0
  %368 = vmatprep.subr.bf16.mxu0 0
  %369 = vmatpush1.bf16.msra.mxu0 0
  %370 = vmatprep.subr.bf16.mxu0 0
  %371 = vmatpush1.bf16.msra.mxu0 0
  %372 = vmatprep.subr.bf16.mxu0 0
  %373 = vmatpush1.bf16.msra.mxu0 0
  %374 = vmatprep.subr.bf16.mxu0 0
  %375 = vmatpush1.bf16.msra.mxu0 0
  %376 = vmatprep.mubr.bf16.mxu0 0
  %377 = vmatmul.mubr.bf16.gmra.mrb[0].mxu0 %v129
  %v378 = vpop.f32.mrb[0].mxu0
  %v379 = vadd.f32 0.0, %v378
  %v380 = vpop.f32.mrb[0].mxu0
  %v381 = vpop.f32.mrb[0].mxu0
  %v382 = vadd.f32 0.0, %v381
  %v383 = vpop.f32.mrb[0].mxu0
  %384 = vmatprep.mubr.bf16.mxu0 0
  %385 = vmatmul.mubr.bf16.gmra.mrb[0].mxu0 %v130
  %v386 = vpop.f32.mrb[0].mxu0
  %v387 = vadd.f32 0.0, %v386
  %v388 = vpop.f32.mrb[0].mxu0
  %v389 = vpop.f32.mrb[0].mxu0
  %v390 = vadd.f32 0.0, %v389
  %v391 = vpop.f32.mrb[0].mxu0
  %392 = vdwg.mxu0
  %v393 = vpack.c.bf16 %v330, %v326
  %v394 = vpack.c.bf16 %v332, %v328
  %v395 = vpack.c.bf16 %v382, %v379
  %v396 = vpack.c.bf16 %v340, %v336
  %v397 = vpack.c.bf16 %v342, %v338
  %v398 = vpack.c.bf16 %v390, %v387
  %v399 = vld [vmem:[%s4] sm:$0xf]
  %v400 = vld [vmem:[%s4 + $0x4] sm:$0xf]
  %v401 = vld [vmem:[%s4 + $0x8] sm:$0xf]
  %v402 = vld [vmem:[%s4 + $0xc] sm:$0xf]
  %s403 = scalar_lea.vmem %s4, 16
  %v404 = vld [vmem:[%s403] sm:$0xf]
  %v405 = vld [vmem:[%s403 + $0x4] sm:$0xf]
  %v406 = vld [vmem:[%s403 + $0x8] sm:$0xf]
  %v407 = vld [vmem:[%s403 + $0xc] sm:$0xf]
  %v412 = vunpack.c.l.b16 %v404
  %v413 = vunpack.c.l.b16 %v405
  %v414 = vunpack.c.l.b16 %v406
  %v415 = vunpack.c.l.b16 %v407
  %v416 = vpack.c.b16 %v413, %v412
  %v417 = vpack.c.b16 %v415, %v414
  %v419 = vsel %vm73, %v416, 0
  %v422 = vsel %vm73, %v417, 0
  %424 = vmatprep.subr.bf16.mxu0 0
  %425 = vmatpush1.bf16.msra.mxu0 %v394
  %426 = vmatprep.subr.bf16.mxu0 0
  %427 = vmatpush1.bf16.msra.mxu0 %v397
  %428 = vmatprep.subr.bf16.mxu0 0
  %429 = vmatpush1.bf16.msra.mxu0 0
  %430 = vmatprep.subr.bf16.mxu0 0
  %431 = vmatpush1.bf16.msra.mxu0 0
  %432 = vmatprep.subr.bf16.mxu0 0
  %433 = vmatpush1.bf16.msra.mxu0 0
  %434 = vmatprep.subr.bf16.mxu0 0
  %435 = vmatpush1.bf16.msra.mxu0 0
  %436 = vmatprep.subr.bf16.mxu0 0
  %437 = vmatpush1.bf16.msra.mxu0 0
  %438 = vmatprep.subr.bf16.mxu0 0
  %439 = vmatpush1.bf16.msra.mxu0 0
  %440 = vmatprep.subr.bf16.mxu0 0
  %441 = vmatpush1.bf16.msra.mxu0 0
  %442 = vmatprep.subr.bf16.mxu0 0
  %443 = vmatpush1.bf16.msra.mxu0 0
  %444 = vmatprep.subr.bf16.mxu0 0
  %445 = vmatpush1.bf16.msra.mxu0 0
  %446 = vmatprep.subr.bf16.mxu0 0
  %447 = vmatpush1.bf16.msra.mxu0 0
  %448 = vmatprep.subr.bf16.mxu0 0
  %449 = vmatpush1.bf16.msra.mxu0 0
  %450 = vmatprep.subr.bf16.mxu0 0
  %451 = vmatpush1.bf16.msra.mxu0 0
  %452 = vmatprep.subr.bf16.mxu0 0
  %453 = vmatpush1.bf16.msra.mxu0 0
  %454 = vmatprep.subr.bf16.mxu0 0
  %455 = vmatpush1.bf16.msra.mxu0 0
  %456 = vmatprep.mubr.bf16.mxu0 0
  %457 = vmatmul.mubr.bf16.gmra.mrb[0].mxu0 %v419
  %v458 = vpop.f32.mrb[0].mxu0
  %v459 = vadd.f32 0.0, %v458
  %v460 = vpop.f32.mrb[0].mxu0
  %v461 = vpop.f32.mrb[0].mxu0
  %v462 = vadd.f32 0.0, %v461
  %v463 = vpop.f32.mrb[0].mxu0
  %464 = vmatprep.mubr.bf16.mxu0 0
  %465 = vmatmul.mubr.bf16.gmra.mrb[0].mxu0 %v422
  %v466 = vpop.f32.mrb[0].mxu0
  %v467 = vadd.f32 0.0, %v466
  %v468 = vpop.f32.mrb[0].mxu0
  %v469 = vpop.f32.mrb[0].mxu0
  %v470 = vadd.f32 0.0, %v469
  %v471 = vpop.f32.mrb[0].mxu0
  %472 = vdwg.mxu0
  %v477 = vunpack.c.l.b16 %v399
  %v478 = vunpack.c.l.b16 %v400
  %v479 = vunpack.c.l.b16 %v401
  %v480 = vunpack.c.l.b16 %v402
  %v481 = vpack.c.b16 %v478, %v477
  %v482 = vpack.c.b16 %v480, %v479
  %v484 = vsel %vm73, %v481, 0
  %v487 = vsel %vm73, %v482, 0
  %489 = vmatprep.subr.bf16.mxu0 0
  %490 = vmatpush1.bf16.msra.mxu0 %v393
  %491 = vmatprep.subr.bf16.mxu0 0
  %492 = vmatpush1.bf16.msra.mxu0 %v396
  %493 = vmatprep.subr.bf16.mxu0 0
  %494 = vmatpush1.bf16.msra.mxu0 0
  %495 = vmatprep.subr.bf16.mxu0 0
  %496 = vmatpush1.bf16.msra.mxu0 0
  %497 = vmatprep.subr.bf16.mxu0 0
  %498 = vmatpush1.bf16.msra.mxu0 0
  %499 = vmatprep.subr.bf16.mxu0 0
  %500 = vmatpush1.bf16.msra.mxu0 0
  %501 = vmatprep.subr.bf16.mxu0 0
  %502 = vmatpush1.bf16.msra.mxu0 0
  %503 = vmatprep.subr.bf16.mxu0 0
  %504 = vmatpush1.bf16.msra.mxu0 0
  %505 = vmatprep.subr.bf16.mxu0 0
  %506 = vmatpush1.bf16.msra.mxu0 0
  %507 = vmatprep.subr.bf16.mxu0 0
  %508 = vmatpush1.bf16.msra.mxu0 0
  %509 = vmatprep.subr.bf16.mxu0 0
  %510 = vmatpush1.bf16.msra.mxu0 0
  %511 = vmatprep.subr.bf16.mxu0 0
  %512 = vmatpush1.bf16.msra.mxu0 0
  %513 = vmatprep.subr.bf16.mxu0 0
  %514 = vmatpush1.bf16.msra.mxu0 0
  %515 = vmatprep.subr.bf16.mxu0 0
  %516 = vmatpush1.bf16.msra.mxu0 0
  %517 = vmatprep.subr.bf16.mxu0 0
  %518 = vmatpush1.bf16.msra.mxu0 0
  %519 = vmatprep.subr.bf16.mxu0 0
  %520 = vmatpush1.bf16.msra.mxu0 0
  %521 = vmatprep.mubr.bf16.mxu0 0
  %522 = vmatmul.mubr.bf16.gmra.mrb[0].mxu0 %v484
  %v523 = vpop.f32.mrb[0].mxu0
  %v524 = vadd.f32 %v459, %v523
  %v525 = vpop.f32.mrb[0].mxu0
  %v526 = vpop.f32.mrb[0].mxu0
  %v527 = vadd.f32 %v462, %v526
  %v528 = vpop.f32.mrb[0].mxu0
  %529 = vmatprep.mubr.bf16.mxu0 0
  %530 = vmatmul.mubr.bf16.gmra.mrb[0].mxu0 %v487
  %v531 = vpop.f32.mrb[0].mxu0
  %v532 = vadd.f32 %v467, %v531
  %v533 = vpop.f32.mrb[0].mxu0
  %v534 = vpop.f32.mrb[0].mxu0
  %v535 = vadd.f32 %v470, %v534
  %v536 = vpop.f32.mrb[0].mxu0
  %537 = vdwg.mxu0
  %s538 = scalar_lea.vmem %s4, 32
  %v539 = vld [vmem:[%s538] sm:$0xf]
  %v540 = vld [vmem:[%s538 + $0x4] sm:$0xf]
  %v541 = vld [vmem:[%s538 + $0x8] sm:$0xf]
  %v542 = vld [vmem:[%s538 + $0xc] sm:$0xf]
  %v547 = vunpack.c.l.b16 %v539
  %v548 = vunpack.c.l.b16 %v540
  %v549 = vunpack.c.l.b16 %v541
  %v550 = vunpack.c.l.b16 %v542
  %v551 = vpack.c.b16 %v548, %v547
  %v552 = vpack.c.b16 %v550, %v549
  %v554 = vsel %vm73, %v551, 0
  %v557 = vsel %vm73, %v552, 0
  %559 = vmatprep.subr.bf16.mxu0 0
  %560 = vmatpush1.bf16.msra.mxu0 %v395
  %561 = vmatprep.subr.bf16.mxu0 0
  %562 = vmatpush1.bf16.msra.mxu0 %v398
  %563 = vmatprep.subr.bf16.mxu0 0
  %564 = vmatpush1.bf16.msra.mxu0 0
  %565 = vmatprep.subr.bf16.mxu0 0
  %566 = vmatpush1.bf16.msra.mxu0 0
  %567 = vmatprep.subr.bf16.mxu0 0
  %568 = vmatpush1.bf16.msra.mxu0 0
  %569 = vmatprep.subr.bf16.mxu0 0
  %570 = vmatpush1.bf16.msra.mxu0 0
  %571 = vmatprep.subr.bf16.mxu0 0
  %572 = vmatpush1.bf16.msra.mxu0 0
  %573 = vmatprep.subr.bf16.mxu0 0
  %574 = vmatpush1.bf16.msra.mxu0 0
  %575 = vmatprep.subr.bf16.mxu0 0
  %576 = vmatpush1.bf16.msra.mxu0 0
  %577 = vmatprep.subr.bf16.mxu0 0
  %578 = vmatpush1.bf16.msra.mxu0 0
  %579 = vmatprep.subr.bf16.mxu0 0
  %580 = vmatpush1.bf16.msra.mxu0 0
  %581 = vmatprep.subr.bf16.mxu0 0
  %582 = vmatpush1.bf16.msra.mxu0 0
  %583 = vmatprep.subr.bf16.mxu0 0
  %584 = vmatpush1.bf16.msra.mxu0 0
  %585 = vmatprep.subr.bf16.mxu0 0
  %586 = vmatpush1.bf16.msra.mxu0 0
  %587 = vmatprep.subr.bf16.mxu0 0
  %588 = vmatpush1.bf16.msra.mxu0 0
  %589 = vmatprep.subr.bf16.mxu0 0
  %590 = vmatpush1.bf16.msra.mxu0 0
  %591 = vmatprep.mubr.bf16.mxu0 0
  %592 = vmatmul.mubr.bf16.gmra.mrb[0].mxu0 %v554
  %v593 = vpop.f32.mrb[0].mxu0
  %v594 = vadd.f32 0.0, %v593
  %v595 = vpop.f32.mrb[0].mxu0
  %v596 = vpop.f32.mrb[0].mxu0
  %v597 = vadd.f32 0.0, %v596
  %v598 = vpop.f32.mrb[0].mxu0
  %599 = vmatprep.mubr.bf16.mxu0 0
  %600 = vmatmul.mubr.bf16.gmra.mrb[0].mxu0 %v557
  %v601 = vpop.f32.mrb[0].mxu0
  %v602 = vadd.f32 0.0, %v601
  %v603 = vpop.f32.mrb[0].mxu0
  %v604 = vpop.f32.mrb[0].mxu0
  %v605 = vadd.f32 0.0, %v604
  %v606 = vpop.f32.mrb[0].mxu0
  %607 = vdwg.mxu0
  %v608 = vadd.f32 %v524, %v594
  %v609 = vadd.f32 %v527, %v597
  %v610 = vadd.f32 %v532, %v602
  %v611 = vadd.f32 %v535, %v605
  %v612 = vld [vmem:[%s6] sm:$0x1]
  %v614 = vlaneseq
  %v615 = vshrl.u32 %v614, 7
  %v616 = vsub.s32 0, %v615
  %v617 = vrot.slane %v612, %v616
  %v619 = vmul.f32 %v608, %v617
  %v620 = vmul.f32 %v609, %v617
  %v621 = vmul.f32 %v610, %v617
  %v622 = vmul.f32 %v611, %v617
  %v623 = vld [vmem:[%s7] sm:$0x1]
  %v625 = vlaneseq
  %v626 = vshrl.u32 %v625, 7
  %v627 = vsub.s32 0, %v626
  %v628 = vrot.slane %v623, %v627
  %v630 = vadd.f32 %v619, %v628
  %v631 = vadd.f32 %v620, %v628
  %v632 = vadd.f32 %v621, %v628
  %v633 = vadd.f32 %v622, %v628
  %v634 = vmax.f32 %v630, 0.0
  %v635 = vmax.f32 %v631, 0.0
  %v636 = vmax.f32 %v632, 0.0
  %v637 = vmax.f32 %v633, 0.0
  %v638 = vadd.f32 %v634, %v115
  %v639 = vadd.f32 %v635, %v118
  %v640 = vadd.f32 %v636, %v123
  %v641 = vadd.f32 %v637, %v126
  %v642 = vmax.f32 %v638, 0.0
  %v643 = vmax.f32 %v639, 0.0
  %v644 = vmax.f32 %v640, 0.0
  %v645 = vmax.f32 %v641, 0.0
  %v646 = vpack.c.bf16 %v643, %v642
  %v647 = vpack.c.bf16 %v645, %v644
  %s648 = scalar_lea.vmem %s5, 192
  %v649 = vld [vmem:[%s648] sm:$0xff]
  %v650 = vld [vmem:[%s648 + $0x8] sm:$0xf]
  %v651 = vld [vmem:[%s648 + $0xc] sm:$0xff]
  %v652 = vld [vmem:[%s648 + $0x14] sm:$0xf]
  %v653 = vld [vmem:[%s648 + $0x18] sm:$0xff]
  %v654 = vld [vmem:[%s648 + $0x20] sm:$0xf]
  %v655 = vld [vmem:[%s648 + $0x24] sm:$0xff]
  %v656 = vld [vmem:[%s648 + $0x2c] sm:$0xf]
  %v657 = vld [vmem:[%s648 + $0x30] sm:$0xff]
  %v658 = vld [vmem:[%s648 + $0x38] sm:$0xf]
  %v659 = vld [vmem:[%s648 + $0x3c] sm:$0xff]
  %v660 = vld [vmem:[%s648 + $0x44] sm:$0xf]
  %v661 = vld [vmem:[%s648 + $0x48] sm:$0xff]
  %v662 = vld [vmem:[%s648 + $0x50] sm:$0xf]
  %v663 = vld [vmem:[%s648 + $0x54] sm:$0xff]
  %v664 = vld [vmem:[%s648 + $0x5c] sm:$0xf]
  %v665 = vld [vmem:[%s648 + $0x60] sm:$0xff]
  %v666 = vld [vmem:[%s648 + $0x68] sm:$0xf]
  %v667 = vld [vmem:[%s648 + $0x6c] sm:$0xff]
  %v668 = vld [vmem:[%s648 + $0x74] sm:$0xf]
  %v669 = vld [vmem:[%s648 + $0x78] sm:$0xff]
  %v670 = vld [vmem:[%s648 + $0x80] sm:$0xf]
  %v671 = vld [vmem:[%s648 + $0x84] sm:$0xff]
  %v672 = vld [vmem:[%s648 + $0x8c] sm:$0xf]
  %v673 = vld [vmem:[%s648 + $0x90] sm:$0xff]
  %v674 = vld [vmem:[%s648 + $0x98] sm:$0xf]
  %v675 = vld [vmem:[%s648 + $0x9c] sm:$0xff]
  %v676 = vld [vmem:[%s648 + $0xa4] sm:$0xf]
  %v677 = vld [vmem:[%s648 + $0xa8] sm:$0xff]
  %v678 = vld [vmem:[%s648 + $0xb0] sm:$0xf]
  %v679 = vld [vmem:[%s648 + $0xb4] sm:$0xff]
  %v680 = vld [vmem:[%s648 + $0xbc] sm:$0xf]
  %v713 = vunpack.c.l.b16 %v649
  %v714 = vunpack.c.h.b16 %v649
  %v715 = vunpack.c.l.b16 %v650
  %v716 = vunpack.c.l.b16 %v651
  %v717 = vunpack.c.h.b16 %v651
  %v718 = vunpack.c.l.b16 %v652
  %v719 = vunpack.c.l.b16 %v653
  %v720 = vunpack.c.h.b16 %v653
  %v721 = vunpack.c.l.b16 %v654
  %v722 = vunpack.c.l.b16 %v655
  %v723 = vunpack.c.h.b16 %v655
  %v724 = vunpack.c.l.b16 %v656
  %v725 = vunpack.c.l.b16 %v657
  %v726 = vunpack.c.h.b16 %v657
  %v727 = vunpack.c.l.b16 %v658
  %v728 = vunpack.c.l.b16 %v659
  %v729 = vunpack.c.h.b16 %v659
  %v730 = vunpack.c.l.b16 %v660
  %v731 = vunpack.c.l.b16 %v661
  %v732 = vunpack.c.h.b16 %v661
  %v733 = vunpack.c.l.b16 %v662
  %v734 = vunpack.c.l.b16 %v663
  %v735 = vunpack.c.h.b16 %v663
  %v736 = vunpack.c.l.b16 %v664
  %v737 = vunpack.c.l.b16 %v665
  %v738 = vunpack.c.h.b16 %v665
  %v739 = vunpack.c.l.b16 %v666
  %v740 = vunpack.c.l.b16 %v667
  %v741 = vunpack.c.h.b16 %v667
  %v742 = vunpack.c.l.b16 %v668
  %v743 = vunpack.c.l.b16 %v669
  %v744 = vunpack.c.h.b16 %v669
  %v745 = vunpack.c.l.b16 %v670
  %v746 = vunpack.c.l.b16 %v671
  %v747 = vunpack.c.h.b16 %v671
  %v748 = vunpack.c.l.b16 %v672
  %v749 = vunpack.c.l.b16 %v673
  %v750 = vunpack.c.h.b16 %v673
  %v751 = vunpack.c.l.b16 %v674
  %v752 = vunpack.c.l.b16 %v675
  %v753 = vunpack.c.h.b16 %v675
  %v754 = vunpack.c.l.b16 %v676
  %v755 = vunpack.c.l.b16 %v677
  %v756 = vunpack.c.h.b16 %v677
  %v757 = vunpack.c.l.b16 %v678
  %v758 = vunpack.c.l.b16 %v679
  %v759 = vunpack.c.h.b16 %v679
  %v760 = vunpack.c.l.b16 %v680
  %v761 = vpack.c.b16 %v716, %v713
  %v762 = vpack.c.b16 %v717, %v714
  %v763 = vpack.c.b16 %v718, %v715
  %v764 = vpack.c.b16 %v722, %v719
  %v765 = vpack.c.b16 %v723, %v720
  %v766 = vpack.c.b16 %v724, %v721
  %v767 = vpack.c.b16 %v728, %v725
  %v768 = vpack.c.b16 %v729, %v726
  %v769 = vpack.c.b16 %v730, %v727
  %v770 = vpack.c.b16 %v734, %v731
  %v771 = vpack.c.b16 %v735, %v732
  %v772 = vpack.c.b16 %v736, %v733
  %v773 = vpack.c.b16 %v740, %v737
  %v774 = vpack.c.b16 %v741, %v738
  %v775 = vpack.c.b16 %v742, %v739
  %v776 = vpack.c.b16 %v746, %v743
  %v777 = vpack.c.b16 %v747, %v744
  %v778 = vpack.c.b16 %v748, %v745
  %v779 = vpack.c.b16 %v752, %v749
  %v780 = vpack.c.b16 %v753, %v750
  %v781 = vpack.c.b16 %v754, %v751
  %v782 = vpack.c.b16 %v758, %v755
  %v783 = vpack.c.b16 %v759, %v756
  %v784 = vpack.c.b16 %v760, %v757
  %809 = vmatprep.subr.bf16.mxu0 %v762
  %810 = vmatpush1.bf16.msra.mxu0 %v761
  %811 = vmatprep.subr.bf16.mxu0 %v765
  %812 = vmatpush1.bf16.msra.mxu0 %v764
  %813 = vmatprep.subr.bf16.mxu0 %v768
  %814 = vmatpush1.bf16.msra.mxu0 %v767
  %815 = vmatprep.subr.bf16.mxu0 %v771
  %816 = vmatpush1.bf16.msra.mxu0 %v770
  %817 = vmatprep.subr.bf16.mxu0 %v774
  %818 = vmatpush1.bf16.msra.mxu0 %v773
  %819 = vmatprep.subr.bf16.mxu0 %v777
  %820 = vmatpush1.bf16.msra.mxu0 %v776
  %821 = vmatprep.subr.bf16.mxu0 %v780
  %822 = vmatpush1.bf16.msra.mxu0 %v779
  %823 = vmatprep.subr.bf16.mxu0 %v783
  %824 = vmatpush1.bf16.msra.mxu0 %v782
  %825 = vmatprep.subr.bf16.mxu0 0
  %826 = vmatpush1.bf16.msra.mxu0 0
  %827 = vmatprep.subr.bf16.mxu0 0
  %828 = vmatpush1.bf16.msra.mxu0 0
  %829 = vmatprep.subr.bf16.mxu0 0
  %830 = vmatpush1.bf16.msra.mxu0 0
  %831 = vmatprep.subr.bf16.mxu0 0
  %832 = vmatpush1.bf16.msra.mxu0 0
  %833 = vmatprep.subr.bf16.mxu0 0
  %834 = vmatpush1.bf16.msra.mxu0 0
  %835 = vmatprep.subr.bf16.mxu0 0
  %836 = vmatpush1.bf16.msra.mxu0 0
  %837 = vmatprep.subr.bf16.mxu0 0
  %838 = vmatpush1.bf16.msra.mxu0 0
  %839 = vmatprep.subr.bf16.mxu0 0
  %840 = vmatpush1.bf16.msra.mxu0 0
  %841 = vmatprep.mubr.bf16.mxu0 0
  %842 = vmatmul.mubr.bf16.gmra.mrb[0].mxu0 %v646
  %v843 = vpop.f32.mrb[0].mxu0
  %v844 = vadd.f32 0.0, %v843
  %v845 = vpop.f32.mrb[0].mxu0
  %v846 = vadd.f32 0.0, %v845
  %v847 = vpop.f32.mrb[0].mxu0
  %v848 = vadd.f32 0.0, %v847
  %v849 = vpop.f32.mrb[0].mxu0
  %v850 = vadd.f32 0.0, %v849
  %851 = vmatprep.mubr.bf16.mxu0 0
  %852 = vmatmul.mubr.bf16.gmra.mrb[0].mxu0 %v647
  %v853 = vpop.f32.mrb[0].mxu0
  %v854 = vadd.f32 0.0, %v853
  %v855 = vpop.f32.mrb[0].mxu0
  %v856 = vadd.f32 0.0, %v855
  %v857 = vpop.f32.mrb[0].mxu0
  %v858 = vadd.f32 0.0, %v857
  %v859 = vpop.f32.mrb[0].mxu0
  %v860 = vadd.f32 0.0, %v859
  %861 = vdwg.mxu0
  %862 = vmatprep.subr.bf16.mxu0 0
  %863 = vmatpush1.bf16.msra.mxu0 %v763
  %864 = vmatprep.subr.bf16.mxu0 0
  %865 = vmatpush1.bf16.msra.mxu0 %v766
  %866 = vmatprep.subr.bf16.mxu0 0
  %867 = vmatpush1.bf16.msra.mxu0 %v769
  %868 = vmatprep.subr.bf16.mxu0 0
  %869 = vmatpush1.bf16.msra.mxu0 %v772
  %870 = vmatprep.subr.bf16.mxu0 0
  %871 = vmatpush1.bf16.msra.mxu0 %v775
  %872 = vmatprep.subr.bf16.mxu0 0
  %873 = vmatpush1.bf16.msra.mxu0 %v778
  %874 = vmatprep.subr.bf16.mxu0 0
  %875 = vmatpush1.bf16.msra.mxu0 %v781
  %876 = vmatprep.subr.bf16.mxu0 0
  %877 = vmatpush1.bf16.msra.mxu0 %v784
  %878 = vmatprep.subr.bf16.mxu0 0
  %879 = vmatpush1.bf16.msra.mxu0 0
  %880 = vmatprep.subr.bf16.mxu0 0
  %881 = vmatpush1.bf16.msra.mxu0 0
  %882 = vmatprep.subr.bf16.mxu0 0
  %883 = vmatpush1.bf16.msra.mxu0 0
  %884 = vmatprep.subr.bf16.mxu0 0
  %885 = vmatpush1.bf16.msra.mxu0 0
  %886 = vmatprep.subr.bf16.mxu0 0
  %887 = vmatpush1.bf16.msra.mxu0 0
  %888 = vmatprep.subr.bf16.mxu0 0
  %889 = vmatpush1.bf16.msra.mxu0 0
  %890 = vmatprep.subr.bf16.mxu0 0
  %891 = vmatpush1.bf16.msra.mxu0 0
  %892 = vmatprep.subr.bf16.mxu0 0
  %893 = vmatpush1.bf16.msra.mxu0 0
  %894 = vmatprep.mubr.bf16.mxu0 0
  %895 = vmatmul.mubr.bf16.gmra.mrb[0].mxu0 %v646
  %v896 = vpop.f32.mrb[0].mxu0
  %v897 = vadd.f32 0.0, %v896
  %v898 = vpop.f32.mrb[0].mxu0
  %v899 = vpop.f32.mrb[0].mxu0
  %v900 = vadd.f32 0.0, %v899
  %v901 = vpop.f32.mrb[0].mxu0
  %902 = vmatprep.mubr.bf16.mxu0 0
  %903 = vmatmul.mubr.bf16.gmra.mrb[0].mxu0 %v647
  %v904 = vpop.f32.mrb[0].mxu0
  %v905 = vadd.f32 0.0, %v904
  %v906 = vpop.f32.mrb[0].mxu0
  %v907 = vpop.f32.mrb[0].mxu0
  %v908 = vadd.f32 0.0, %v907
  %v909 = vpop.f32.mrb[0].mxu0
  %910 = vdwg.mxu0
  %v911 = vpack.c.bf16 %v848, %v844
  %v912 = vpack.c.bf16 %v850, %v846
  %v913 = vpack.c.bf16 %v900, %v897
  %v914 = vpack.c.bf16 %v858, %v854
  %v915 = vpack.c.bf16 %v860, %v856
  %v916 = vpack.c.bf16 %v908, %v905
  %s917 = scalar_lea.vmem %s4, 48
  %v918 = vld [vmem:[%s917] sm:$0xf]
  %v919 = vld [vmem:[%s917 + $0x4] sm:$0xf]
  %v920 = vld [vmem:[%s917 + $0x8] sm:$0xf]
  %v921 = vld [vmem:[%s917 + $0xc] sm:$0xf]
  %s922 = scalar_lea.vmem %s4, 64
  %v923 = vld [vmem:[%s922] sm:$0xf]
  %v924 = vld [vmem:[%s922 + $0x4] sm:$0xf]
  %v925 = vld [vmem:[%s922 + $0x8] sm:$0xf]
  %v926 = vld [vmem:[%s922 + $0xc] sm:$0xf]
  %v931 = vunpack.c.l.b16 %v923
  %v932 = vunpack.c.l.b16 %v924
  %v933 = vunpack.c.l.b16 %v925
  %v934 = vunpack.c.l.b16 %v926
  %v935 = vpack.c.b16 %v932, %v931
  %v936 = vpack.c.b16 %v934, %v933
  %v938 = vsel %vm73, %v935, 0
  %v941 = vsel %vm73, %v936, 0
  %943 = vmatprep.subr.bf16.mxu0 0
  %944 = vmatpush1.bf16.msra.mxu0 %v912
  %945 = vmatprep.subr.bf16.mxu0 0
  %946 = vmatpush1.bf16.msra.mxu0 %v915
  %947 = vmatprep.subr.bf16.mxu0 0
  %948 = vmatpush1.bf16.msra.mxu0 0
  %949 = vmatprep.subr.bf16.mxu0 0
  %950 = vmatpush1.bf16.msra.mxu0 0
  %951 = vmatprep.subr.bf16.mxu0 0
  %952 = vmatpush1.bf16.msra.mxu0 0
  %953 = vmatprep.subr.bf16.mxu0 0
  %954 = vmatpush1.bf16.msra.mxu0 0
  %955 = vmatprep.subr.bf16.mxu0 0
  %956 = vmatpush1.bf16.msra.mxu0 0
  %957 = vmatprep.subr.bf16.mxu0 0
  %958 = vmatpush1.bf16.msra.mxu0 0
  %959 = vmatprep.subr.bf16.mxu0 0
  %960 = vmatpush1.bf16.msra.mxu0 0
  %961 = vmatprep.subr.bf16.mxu0 0
  %962 = vmatpush1.bf16.msra.mxu0 0
  %963 = vmatprep.subr.bf16.mxu0 0
  %964 = vmatpush1.bf16.msra.mxu0 0
  %965 = vmatprep.subr.bf16.mxu0 0
  %966 = vmatpush1.bf16.msra.mxu0 0
  %967 = vmatprep.subr.bf16.mxu0 0
  %968 = vmatpush1.bf16.msra.mxu0 0
  %969 = vmatprep.subr.bf16.mxu0 0
  %970 = vmatpush1.bf16.msra.mxu0 0
  %971 = vmatprep.subr.bf16.mxu0 0
  %972 = vmatpush1.bf16.msra.mxu0 0
  %973 = vmatprep.subr.bf16.mxu0 0
  %974 = vmatpush1.bf16.msra.mxu0 0
  %975 = vmatprep.mubr.bf16.mxu0 0
  %976 = vmatmul.mubr.bf16.gmra.mrb[0].mxu0 %v938
  %v977 = vpop.f32.mrb[0].mxu0
  %v978 = vadd.f32 0.0, %v977
  %v979 = vpop.f32.mrb[0].mxu0
  %v980 = vpop.f32.mrb[0].mxu0
  %v981 = vadd.f32 0.0, %v980
  %v982 = vpop.f32.mrb[0].mxu0
  %983 = vmatprep.mubr.bf16.mxu0 0
  %984 = vmatmul.mubr.bf16.gmra.mrb[0].mxu0 %v941
  %v985 = vpop.f32.mrb[0].mxu0
  %v986 = vadd.f32 0.0, %v985
  %v987 = vpop.f32.mrb[0].mxu0
  %v988 = vpop.f32.mrb[0].mxu0
  %v989 = vadd.f32 0.0, %v988
  %v990 = vpop.f32.mrb[0].mxu0
  %991 = vdwg.mxu0
  %v996 = vunpack.c.l.b16 %v918
  %v997 = vunpack.c.l.b16 %v919
  %v998 = vunpack.c.l.b16 %v920
  %v999 = vunpack.c.l.b16 %v921
  %v1000 = vpack.c.b16 %v997, %v996
  %v1001 = vpack.c.b16 %v999, %v998
  %v1003 = vsel %vm73, %v1000, 0
  %v1006 = vsel %vm73, %v1001, 0
  %1008 = vmatprep.subr.bf16.mxu0 0
  %1009 = vmatpush1.bf16.msra.mxu0 %v911
  %1010 = vmatprep.subr.bf16.mxu0 0
  %1011 = vmatpush1.bf16.msra.mxu0 %v914
  %1012 = vmatprep.subr.bf16.mxu0 0
  %1013 = vmatpush1.bf16.msra.mxu0 0
  %1014 = vmatprep.subr.bf16.mxu0 0
  %1015 = vmatpush1.bf16.msra.mxu0 0
  %1016 = vmatprep.subr.bf16.mxu0 0
  %1017 = vmatpush1.bf16.msra.mxu0 0
  %1018 = vmatprep.subr.bf16.mxu0 0
  %1019 = vmatpush1.bf16.msra.mxu0 0
  %1020 = vmatprep.subr.bf16.mxu0 0
  %1021 = vmatpush1.bf16.msra.mxu0 0
  %1022 = vmatprep.subr.bf16.mxu0 0
  %1023 = vmatpush1.bf16.msra.mxu0 0
  %1024 = vmatprep.subr.bf16.mxu0 0
  %1025 = vmatpush1.bf16.msra.mxu0 0
  %1026 = vmatprep.subr.bf16.mxu0 0
  %1027 = vmatpush1.bf16.msra.mxu0 0
  %1028 = vmatprep.subr.bf16.mxu0 0
  %1029 = vmatpush1.bf16.msra.mxu0 0
  %1030 = vmatprep.subr.bf16.mxu0 0
  %1031 = vmatpush1.bf16.msra.mxu0 0
  %1032 = vmatprep.subr.bf16.mxu0 0
  %1033 = vmatpush1.bf16.msra.mxu0 0
  %1034 = vmatprep.subr.bf16.mxu0 0
  %1035 = vmatpush1.bf16.msra.mxu0 0
  %1036 = vmatprep.subr.bf16.mxu0 0
  %1037 = vmatpush1.bf16.msra.mxu0 0
  %1038 = vmatprep.subr.bf16.mxu0 0
  %1039 = vmatpush1.bf16.msra.mxu0 0
  %1040 = vmatprep.mubr.bf16.mxu0 0
  %1041 = vmatmul.mubr.bf16.gmra.mrb[0].mxu0 %v1003
  %v1042 = vpop.f32.mrb[0].mxu0
  %v1043 = vadd.f32 %v978, %v1042
  %v1044 = vpop.f32.mrb[0].mxu0
  %v1045 = vpop.f32.mrb[0].mxu0
  %v1046 = vadd.f32 %v981, %v1045
  %v1047 = vpop.f32.mrb[0].mxu0
  %1048 = vmatprep.mubr.bf16.mxu0 0
  %1049 = vmatmul.mubr.bf16.gmra.mrb[0].mxu0 %v1006
  %v1050 = vpop.f32.mrb[0].mxu0
  %v1051 = vadd.f32 %v986, %v1050
  %v1052 = vpop.f32.mrb[0].mxu0
  %v1053 = vpop.f32.mrb[0].mxu0
  %v1054 = vadd.f32 %v989, %v1053
  %v1055 = vpop.f32.mrb[0].mxu0
  %1056 = vdwg.mxu0
  %s1057 = scalar_lea.vmem %s4, 80
  %v1058 = vld [vmem:[%s1057] sm:$0xf]
  %v1059 = vld [vmem:[%s1057 + $0x4] sm:$0xf]
  %v1060 = vld [vmem:[%s1057 + $0x8] sm:$0xf]
  %v1061 = vld [vmem:[%s1057 + $0xc] sm:$0xf]
  %v1066 = vunpack.c.l.b16 %v1058
  %v1067 = vunpack.c.l.b16 %v1059
  %v1068 = vunpack.c.l.b16 %v1060
  %v1069 = vunpack.c.l.b16 %v1061
  %v1070 = vpack.c.b16 %v1067, %v1066
  %v1071 = vpack.c.b16 %v1069, %v1068
  %v1073 = vsel %vm73, %v1070, 0
  %v1076 = vsel %vm73, %v1071, 0
  %1078 = vmatprep.subr.bf16.mxu0 0
  %1079 = vmatpush1.bf16.msra.mxu0 %v913
  %1080 = vmatprep.subr.bf16.mxu0 0
  %1081 = vmatpush1.bf16.msra.mxu0 %v916
  %1082 = vmatprep.subr.bf16.mxu0 0
  %1083 = vmatpush1.bf16.msra.mxu0 0
  %1084 = vmatprep.subr.bf16.mxu0 0
  %1085 = vmatpush1.bf16.msra.mxu0 0
  %1086 = vmatprep.subr.bf16.mxu0 0
  %1087 = vmatpush1.bf16.msra.mxu0 0
  %1088 = vmatprep.subr.bf16.mxu0 0
  %1089 = vmatpush1.bf16.msra.mxu0 0
  %1090 = vmatprep.subr.bf16.mxu0 0
  %1091 = vmatpush1.bf16.msra.mxu0 0
  %1092 = vmatprep.subr.bf16.mxu0 0
  %1093 = vmatpush1.bf16.msra.mxu0 0
  %1094 = vmatprep.subr.bf16.mxu0 0
  %1095 = vmatpush1.bf16.msra.mxu0 0
  %1096 = vmatprep.subr.bf16.mxu0 0
  %1097 = vmatpush1.bf16.msra.mxu0 0
  %1098 = vmatprep.subr.bf16.mxu0 0
  %1099 = vmatpush1.bf16.msra.mxu0 0
  %1100 = vmatprep.subr.bf16.mxu0 0
  %1101 = vmatpush1.bf16.msra.mxu0 0
  %1102 = vmatprep.subr.bf16.mxu0 0
  %1103 = vmatpush1.bf16.msra.mxu0 0
  %1104 = vmatprep.subr.bf16.mxu0 0
  %1105 = vmatpush1.bf16.msra.mxu0 0
  %1106 = vmatprep.subr.bf16.mxu0 0
  %1107 = vmatpush1.bf16.msra.mxu0 0
  %1108 = vmatprep.subr.bf16.mxu0 0
  %1109 = vmatpush1.bf16.msra.mxu0 0
  %1110 = vmatprep.mubr.bf16.mxu0 0
  %1111 = vmatmul.mubr.bf16.gmra.mrb[0].mxu0 %v1073
  %v1112 = vpop.f32.mrb[0].mxu0
  %v1113 = vadd.f32 0.0, %v1112
  %v1114 = vpop.f32.mrb[0].mxu0
  %v1115 = vpop.f32.mrb[0].mxu0
  %v1116 = vadd.f32 0.0, %v1115
  %v1117 = vpop.f32.mrb[0].mxu0
  %1118 = vmatprep.mubr.bf16.mxu0 0
  %1119 = vmatmul.mubr.bf16.gmra.mrb[0].mxu0 %v1076
  %v1120 = vpop.f32.mrb[0].mxu0
  %v1121 = vadd.f32 0.0, %v1120
  %v1122 = vpop.f32.mrb[0].mxu0
  %v1123 = vpop.f32.mrb[0].mxu0
  %v1124 = vadd.f32 0.0, %v1123
  %v1125 = vpop.f32.mrb[0].mxu0
  %1126 = vdwg.mxu0
  %v1127 = vadd.f32 %v1043, %v1113
  %v1128 = vadd.f32 %v1046, %v1116
  %v1129 = vadd.f32 %v1051, %v1121
  %v1130 = vadd.f32 %v1054, %v1124
  %s1131 = scalar_lea.vmem %s6, 1
  %v1132 = vld [vmem:[%s1131] sm:$0x1]
  %v1134 = vlaneseq
  %v1135 = vshrl.u32 %v1134, 7
  %v1136 = vsub.s32 0, %v1135
  %v1137 = vrot.slane %v1132, %v1136
  %v1139 = vmul.f32 %v1127, %v1137
  %v1140 = vmul.f32 %v1128, %v1137
  %v1141 = vmul.f32 %v1129, %v1137
  %v1142 = vmul.f32 %v1130, %v1137
  %s1143 = scalar_lea.vmem %s7, 1
  %v1144 = vld [vmem:[%s1143] sm:$0x1]
  %v1146 = vlaneseq
  %v1147 = vshrl.u32 %v1146, 7
  %v1148 = vsub.s32 0, %v1147
  %v1149 = vrot.slane %v1144, %v1148
  %v1151 = vadd.f32 %v1139, %v1149
  %v1152 = vadd.f32 %v1140, %v1149
  %v1153 = vadd.f32 %v1141, %v1149
  %v1154 = vadd.f32 %v1142, %v1149
  %v1155 = vmax.f32 %v1151, 0.0
  %v1156 = vmax.f32 %v1152, 0.0
  %v1157 = vmax.f32 %v1153, 0.0
  %v1158 = vmax.f32 %v1154, 0.0
  %v1159 = vadd.f32 %v1155, %v642
  %v1160 = vadd.f32 %v1156, %v643
  %v1161 = vadd.f32 %v1157, %v644
  %v1162 = vadd.f32 %v1158, %v645
  %v1163 = vmax.f32 %v1159, 0.0
  %v1164 = vmax.f32 %v1160, 0.0
  %v1165 = vmax.f32 %v1161, 0.0
  %v1166 = vmax.f32 %v1162, 0.0
  %v1167 = vld [vmem:[%s8] sm:$0x3]
  %v1169 = vsel %vm73, %v1167, 0
  %1171 = vmatprep.subr.mxu0 0.0
  %1172 = vmatpush1.msra.mxu0 %v1163
  %1173 = vmatprep.subr.mxu0 0.0
  %1174 = vmatpush1.msra.mxu0 %v1164
  %1175 = vmatprep.subr.mxu0 0.0
  %1176 = vmatpush1.msra.mxu0 %v1165
  %1177 = vmatprep.subr.mxu0 0.0
  %1178 = vmatpush1.msra.mxu0 %v1166
  %1179 = vmatprep.subr.mxu0 0.0
  %1180 = vmatpush1.msra.mxu0 0.0
  %1181 = vmatprep.subr.mxu0 0.0
  %1182 = vmatpush1.msra.mxu0 0.0
  %1183 = vmatprep.subr.mxu0 0.0
  %1184 = vmatpush1.msra.mxu0 0.0
  %1185 = vmatprep.subr.mxu0 0.0
  %1186 = vmatpush1.msra.mxu0 0.0
  %1187 = vmatprep.subr.mxu0 0.0
  %1188 = vmatpush1.msra.mxu0 0.0
  %1189 = vmatprep.subr.mxu0 0.0
  %1190 = vmatpush1.msra.mxu0 0.0
  %1191 = vmatprep.subr.mxu0 0.0
  %1192 = vmatpush1.msra.mxu0 0.0
  %1193 = vmatprep.subr.mxu0 0.0
  %1194 = vmatpush1.msra.mxu0 0.0
  %1195 = vmatprep.subr.mxu0 0.0
  %1196 = vmatpush1.msra.mxu0 0.0
  %1197 = vmatprep.subr.mxu0 0.0
  %1198 = vmatpush1.msra.mxu0 0.0
  %1199 = vmatprep.subr.mxu0 0.0
  %1200 = vmatpush1.msra.mxu0 0.0
  %1201 = vmatprep.subr.mxu0 0.0
  %1202 = vmatpush1.msra.mxu0 0.0
  %1203 = vmatprep.subr.mxu0 0.0
  %1204 = vmatpush1.msra.mxu0 0.0
  %1205 = vmatprep.subr.mxu0 0.0
  %1206 = vmatpush1.msra.mxu0 0.0
  %1207 = vmatprep.subr.mxu0 0.0
  %1208 = vmatpush1.msra.mxu0 0.0
  %1209 = vmatprep.subr.mxu0 0.0
  %1210 = vmatpush1.msra.mxu0 0.0
  %1211 = vmatprep.subr.mxu0 0.0
  %1212 = vmatpush1.msra.mxu0 0.0
  %1213 = vmatprep.subr.mxu0 0.0
  %1214 = vmatpush1.msra.mxu0 0.0
  %1215 = vmatprep.subr.mxu0 0.0
  %1216 = vmatpush1.msra.mxu0 0.0
  %1217 = vmatprep.subr.mxu0 0.0
  %1218 = vmatpush1.msra.mxu0 0.0
  %1219 = vmatprep.subr.mxu0 0.0
  %1220 = vmatpush1.msra.mxu0 0.0
  %1221 = vmatprep.subr.mxu0 0.0
  %1222 = vmatpush1.msra.mxu0 0.0
  %1223 = vmatprep.subr.mxu0 0.0
  %1224 = vmatpush1.msra.mxu0 0.0
  %1225 = vmatprep.subr.mxu0 0.0
  %1226 = vmatpush1.msra.mxu0 0.0
  %1227 = vmatprep.subr.mxu0 0.0
  %1228 = vmatpush1.msra.mxu0 0.0
  %1229 = vmatprep.subr.mxu0 0.0
  %1230 = vmatpush1.msra.mxu0 0.0
  %1231 = vmatprep.subr.mxu0 0.0
  %1232 = vmatpush1.msra.mxu0 0.0
  %1233 = vmatprep.subr.mxu0 0.0
  %1234 = vmatpush1.msra.mxu0 0.0
  %1235 = vmatprep.mubr.f32.mxu0 0.0
  %1236 = vmatmul.mubr.f32.gmra.mrb[0].mxu0 %v1169
  %v1237 = vpop.f32.mrb[0].mxu0
  %v1238 = vadd.f32 0.0, %v1237
  %v1239 = vpop.f32.mrb[0].mxu0
  %1240 = vdwg.mxu0
  %v1241 = vpack.c.bf16 %v1238, %v1238
  %v1242 = vld [vmem:[%s9] sm:$0xf]
  %v1243 = vld [vmem:[%s9 + $0x4] sm:$0xf]
  %v1244 = vld [vmem:[%s9 + $0x8] sm:$0xf]
  %v1245 = vld [vmem:[%s9 + $0xc] sm:$0xf]
  %v1246 = vld [vmem:[%s9 + $0x10] sm:$0xf]
  %v1247 = vld [vmem:[%s9 + $0x14] sm:$0xf]
  %v1248 = vld [vmem:[%s9 + $0x18] sm:$0xf]
  %v1249 = vld [vmem:[%s9 + $0x1c] sm:$0xf]
  %v1250 = vld [vmem:[%s9 + $0x20] sm:$0xf]
  %v1251 = vld [vmem:[%s9 + $0x24] sm:$0xf]
  %v1252 = vld [vmem:[%s9 + $0x28] sm:$0xf]
  %v1253 = vld [vmem:[%s9 + $0x2c] sm:$0xf]
  %v1254 = vld [vmem:[%s9 + $0x30] sm:$0xf]
  %v1255 = vld [vmem:[%s9 + $0x34] sm:$0xf]
  %v1256 = vld [vmem:[%s9 + $0x38] sm:$0xf]
  %v1257 = vld [vmem:[%s9 + $0x3c] sm:$0xf]
  %v1258 = vld [vmem:[%s10] sm:$0x1]
  %v1260 = vlaneseq
  %v1261 = vshrl.u32 %v1260, 7
  %v1262 = vsub.s32 0, %v1261
  %v1263 = vrot.slane %v1258, %v1262
  %v1281 = vunpack.c.l.b16 %v1242
  %v1282 = vunpack.c.l.b16 %v1243
  %v1283 = vunpack.c.l.b16 %v1244
  %v1284 = vunpack.c.l.b16 %v1245
  %v1285 = vunpack.c.l.b16 %v1246
  %v1286 = vunpack.c.l.b16 %v1247
  %v1287 = vunpack.c.l.b16 %v1248
  %v1288 = vunpack.c.l.b16 %v1249
  %v1289 = vunpack.c.l.b16 %v1250
  %v1290 = vunpack.c.l.b16 %v1251
  %v1291 = vunpack.c.l.b16 %v1252
  %v1292 = vunpack.c.l.b16 %v1253
  %v1293 = vunpack.c.l.b16 %v1254
  %v1294 = vunpack.c.l.b16 %v1255
  %v1295 = vunpack.c.l.b16 %v1256
  %v1296 = vunpack.c.l.b16 %v1257
  %v1297 = vpack.c.b16 %v1282, %v1281
  %v1298 = vpack.c.b16 %v1284, %v1283
  %v1299 = vpack.c.b16 %v1286, %v1285
  %v1300 = vpack.c.b16 %v1288, %v1287
  %v1301 = vpack.c.b16 %v1290, %v1289
  %v1302 = vpack.c.b16 %v1292, %v1291
  %v1303 = vpack.c.b16 %v1294, %v1293
  %v1304 = vpack.c.b16 %v1296, %v1295
  %1313 = vmatprep.subr.bf16.mxu0 0
  %1314 = vmatpush1.bf16.msra.mxu0 %v1297
  %1315 = vmatprep.subr.bf16.mxu0 0
  %1316 = vmatpush1.bf16.msra.mxu0 %v1298
  %1317 = vmatprep.subr.bf16.mxu0 0
  %1318 = vmatpush1.bf16.msra.mxu0 %v1299
  %1319 = vmatprep.subr.bf16.mxu0 0
  %1320 = vmatpush1.bf16.msra.mxu0 %v1300
  %1321 = vmatprep.subr.bf16.mxu0 0
  %1322 = vmatpush1.bf16.msra.mxu0 %v1301
  %1323 = vmatprep.subr.bf16.mxu0 0
  %1324 = vmatpush1.bf16.msra.mxu0 %v1302
  %1325 = vmatprep.subr.bf16.mxu0 0
  %1326 = vmatpush1.bf16.msra.mxu0 %v1303
  %1327 = vmatprep.subr.bf16.mxu0 0
  %1328 = vmatpush1.bf16.msra.mxu0 %v1304
  %1329 = vmatprep.subr.bf16.mxu0 0
  %1330 = vmatpush1.bf16.msra.mxu0 0
  %1331 = vmatprep.subr.bf16.mxu0 0
  %1332 = vmatpush1.bf16.msra.mxu0 0
  %1333 = vmatprep.subr.bf16.mxu0 0
  %1334 = vmatpush1.bf16.msra.mxu0 0
  %1335 = vmatprep.subr.bf16.mxu0 0
  %1336 = vmatpush1.bf16.msra.mxu0 0
  %1337 = vmatprep.subr.bf16.mxu0 0
  %1338 = vmatpush1.bf16.msra.mxu0 0
  %1339 = vmatprep.subr.bf16.mxu0 0
  %1340 = vmatpush1.bf16.msra.mxu0 0
  %1341 = vmatprep.subr.bf16.mxu0 0
  %1342 = vmatpush1.bf16.msra.mxu0 0
  %1343 = vmatprep.subr.bf16.mxu0 0
  %1344 = vmatpush1.bf16.msra.mxu0 0
  %1345 = vmatprep.mubr.bf16.mxu0 0
  %1346 = vmatmul.mubr.bf16.gmra.mrb[0].mxu0 %v1241
  %v1347 = vpop.f32.mrb[0].mxu0
  %v1348 = vadd.f32 %v1263, %v1347
  %v1349 = vpop.f32.mrb[0].mxu0
  %v1350 = vpop.f32.mrb[0].mxu0
  %v1351 = vpop.f32.mrb[0].mxu0
  %1352 = vdwg.mxu0
  %vm1353 = vcmask 517120
  %1354 = vst.msk [vmem:[%s11] sm:$0x3] %vm1353, %v1348
  // Predicated region
  $region46: #{forward.1} parent=0 // pred_check
    _
  $region47: #{forward.1} parent=0 // pred_check_branch
    %1356 = sbr.rel (0) target = $region49
  $region48: #{forward.1} parent=0 // pred_region
    _
  $region49: #{forward.1} parent=0 // pred_fallthru
    _
  // Predicated region
  $region50: #{forward.1} parent=0 // pred_check
    _
  $region51: #{forward.1} parent=0 // pred_check_branch
    %1358 = sbr.rel (0) target = $region53
  $region52: #{forward.1} parent=0 // pred_region
    _
  $region53: #{forward.1} parent=0 // pred_fallthru
    _

</llo_original>
